<compile_context>
chip_gen: v7x
topology: tpu7x:2x2x1
jax: 0.10.0
libtpu: 0.0.40
codegen_flags: <defaults>
</compile_context>

<pallas_src>
import jax
import jax.numpy as jnp
from jax.experimental import pallas as pl
from jax.experimental.pallas import tpu as pltpu


def ags_kernel(x_ref, wqkv_ref, wmask_ref, o_ref):
    # x_ref:    (1, C, N)   f32, N = H*W
    # wqkv_ref: (3*Ci, C)   f32, rows = [W_phi; W_theta; W_g]
    # wmask_ref:(C, Ci)     f32
    # o_ref:    (1, C, N)   f32
    _, C, N = x_ref.shape
    Ci = wmask_ref.shape[1]
    R = C // Ci              # torch .view(b, c, -1) splitting factor (== 8)
    M = N // R

    x = x_ref[0]                                                         # (C, N)

    # Fused phi/theta/g 1x1 convs: one (3Ci, C) @ (C, N) matmul, K = C.
    qkv = jnp.dot(wqkv_ref[...], x, preferred_element_type=jnp.float32)  # (3Ci, N)
    phi = qkv[0:Ci]                                                      # (Ci, N)
    theta = qkv[Ci:2 * Ci]                                               # (Ci, N)
    g = qkv[2 * Ci:3 * Ci]                                               # (Ci, N)

    # Torch view: x_phi[j_ci*R + s, k] = phi[j_ci, s*M + k]. For the logits we
    # only need a contraction over ALL rows j, so the row ordering is free as
    # long as phi and theta use the same one -> stack lane-chunks on sublanes.
    p_stk = jnp.concatenate([phi[:, s * M:(s + 1) * M] for s in range(R)], axis=0)    # (C, M)
    t_stk = jnp.concatenate([theta[:, s * M:(s + 1) * M] for s in range(R)], axis=0)  # (C, M)

    # a2 = A.T where A = x_theta @ x_phi  -> single K=C MXU matmul.
    a2 = jax.lax.dot_general(p_stk, t_stk, (((0,), (0,)), ((), ())),
                             preferred_element_type=jnp.float32)          # (M, M)

    # torch softmax(dim=1) on A  ==  row softmax (axis=-1) on A.T.
    a2 = a2 - jnp.max(a2, axis=-1, keepdims=True)
    e = jnp.exp(a2)
    s2 = e / jnp.sum(e, axis=-1, keepdims=True)                           # (M, M) = S.T

    # Fold conv_mask to the left: out[:, s*M:(s+1)*M] = (W_mask @ g)_s @ S.T
    gm = jnp.dot(wmask_ref[...], g, preferred_element_type=jnp.float32)   # (C, N)
    out_chunks = [
        jnp.dot(gm[:, s * M:(s + 1) * M], s2, preferred_element_type=jnp.float32)
        for s in range(R)
    ]
    # Assemble once in registers and issue a single lane-dense store.
    o_ref[0] = jnp.concatenate(out_chunks, axis=-1)                       # (C, N)


def ags_forward(x_nchw, w_phi, w_theta, w_g, w_mask):
    """Pallas AGS forward. x_nchw: (B, C, H, W) f32 -> (B, C, H, W) f32."""
    B, C, H, W = x_nchw.shape
    Ci = w_phi.shape[0]
    N = H * W
    R = C // Ci
    # Conditions implied by the torch `.view(b, c, -1)` on a (b, c//8, h, w) tensor.
    assert C == R * Ci and N % R == 0, "AGS requires C % 8 == 0 and (H*W) % 8 == 0"

    x = x_nchw.reshape(B, C, N).astype(jnp.float32)          # lane-dense trailing dim
    wqkv = jnp.concatenate([w_phi, w_theta, w_g], axis=0).astype(jnp.float32)  # (3Ci, C)
    wm = w_mask.astype(jnp.float32)                                            # (C, Ci)

    out = pl.pallas_call(
        ags_kernel,
        out_shape=jax.ShapeDtypeStruct((B, C, N), jnp.float32),
        grid=(B,),
        in_specs=[
            pl.BlockSpec((1, C, N), lambda b: (b, 0, 0)),
            pl.BlockSpec((3 * Ci, C), lambda b: (0, 0)),
            pl.BlockSpec((C, Ci), lambda b: (0, 0)),
        ],
        out_specs=pl.BlockSpec((1, C, N), lambda b: (b, 0, 0)),
        compiler_params=pltpu.CompilerParams(
            dimension_semantics=("parallel",),          # batch split across TCs (v7x)
            vmem_limit_bytes=32 * 1024 * 1024,          # safe on v5e/v6e/v7x
        ),
    )(x, wqkv, wm)
    return out.reshape(B, C, H, W)


def ags_reference(x, w_phi, w_theta, w_g, w_mask):
    """Pure-JAX literal transcription of the PyTorch forward (for checking)."""
    B, C, H, W = x.shape
    Ci = w_phi.shape[0]
    hp = jax.lax.Precision.HIGHEST

    def conv1x1(w, t):
        return jnp.einsum("oc,bchw->bohw", w, t, precision=hp)

    x_phi = conv1x1(w_phi, x).reshape(B, C, -1)                          # (B, C, M)
    x_theta = conv1x1(w_theta, x).reshape(B, C, -1).transpose(0, 2, 1)   # (B, M, C)
    x_g = conv1x1(w_g, x).reshape(B, C, -1).transpose(0, 2, 1)           # (B, M, C)
    a = jnp.einsum("bmc,bcn->bmn", x_theta, x_phi, precision=hp)         # (B, M, M)
    s = jax.nn.softmax(a, axis=1)                                        # dim=1
    y = jnp.einsum("bmn,bnc->bmc", s, x_g, precision=hp)                 # (B, M, C)
    y = y.transpose(0, 2, 1).reshape(B, Ci, H, W)
    return jnp.einsum("oc,bchw->bohw", w_mask, y, precision=hp)


if __name__ == "__main__":
    # channel must be divisible by 8 for inter_channel = channel // 8 and the
    # .view() to be well defined; pick a small Monodepth2-ish feature map.
    B, C, H, W = 2, 64, 16, 16
    Ci = C // 8

    key = jax.random.PRNGKey(0)
    kx, k1, k2, k3, k4 = jax.random.split(key, 5)
    x = jax.random.normal(kx, (B, C, H, W), jnp.float32)
    w_phi = 0.05 * jax.random.normal(k1, (Ci, C), jnp.float32)    # Conv2d(C->Ci, 1x1, no bias)
    w_theta = 0.05 * jax.random.normal(k2, (Ci, C), jnp.float32)
    w_g = 0.05 * jax.random.normal(k3, (Ci, C), jnp.float32)
    w_mask = 0.2 * jax.random.normal(k4, (C, Ci), jnp.float32)    # Conv2d(Ci->C, 1x1, no bias)

    out = jax.block_until_ready(ags_forward(x, w_phi, w_theta, w_g, w_mask))
    ref = jax.block_until_ready(ags_reference(x, w_phi, w_theta, w_g, w_mask))

    assert out.shape == (B, C, H, W)
    err = float(jnp.max(jnp.abs(out - ref)))
    assert jnp.allclose(out, ref, atol=2e-2, rtol=2e-2), f"max abs err {err}"
    print("KERNEL_OK")
</pallas_src>

<mosaic_0001>
module attributes {stable_mosaic.version = 11 : i64} {
  func.func @ags_kernel(%arg0: i32, %arg1: memref<1x64x256xf32, #tpu.memory_space<vmem>>, %arg2: memref<24x64xf32, #tpu.memory_space<vmem>>, %arg3: memref<64x8xf32, #tpu.memory_space<vmem>>, %arg4: memref<1x64x256xf32, #tpu.memory_space<vmem>>) attributes {dimension_semantics = [#tpu.dimension_semantics<parallel>], iteration_bounds = array<i64: 2>, scalar_prefetch = 0 : i64, scratch_operands = 0 : i64, tpu.core_type = #tpu.core_type<tc>, window_params = [{transform_indices = @transform_0, window_bounds = array<i64: 1, 64, 256>}, {pipeline_mode = #tpu.pipeline_mode<synchronous>, transform_indices = @transform_1, window_bounds = array<i64: 24, 64>}, {pipeline_mode = #tpu.pipeline_mode<synchronous>, transform_indices = @transform_2, window_bounds = array<i64: 64, 8>}, {transform_indices = @transform_3, window_bounds = array<i64: 1, 64, 256>}]} {
    %c0 = arith.constant 0 : index
    %c0_0 = arith.constant 0 : index
    %c0_1 = arith.constant 0 : index
    %0 = vector.load %arg1[%c0, %c0_0, %c0_1] : memref<1x64x256xf32, #tpu.memory_space<vmem>>, vector<1x64x256xf32>
    %1 = vector.shape_cast %0 : vector<1x64x256xf32> to vector<64x256xf32>
    %c0_2 = arith.constant 0 : index
    %c0_3 = arith.constant 0 : index
    %2 = vector.load %arg2[%c0_2, %c0_3] : memref<24x64xf32, #tpu.memory_space<vmem>>, vector<24x64xf32>
    %cst = arith.constant dense<0.000000e+00> : vector<24x256xf32>
    %3 = tpu.matmul %2, %1, %cst {dimension_numbers = #tpu.dot_dimension_numbers<[1], [0], [0], [1], [0, 0, 1, 1], [], []>} : vector<24x64xf32>, vector<64x256xf32>, vector<24x256xf32> -> vector<24x256xf32>
    %4 = vector.extract_strided_slice %3 {offsets = [0, 0], sizes = [8, 256], strides = [1, 1]} : vector<24x256xf32> to vector<8x256xf32>
    %5 = vector.extract_strided_slice %3 {offsets = [8, 0], sizes = [8, 256], strides = [1, 1]} : vector<24x256xf32> to vector<8x256xf32>
    %6 = vector.extract_strided_slice %3 {offsets = [16, 0], sizes = [8, 256], strides = [1, 1]} : vector<24x256xf32> to vector<8x256xf32>
    %7 = vector.extract_strided_slice %4 {offsets = [0, 0], sizes = [8, 32], strides = [1, 1]} : vector<8x256xf32> to vector<8x32xf32>
    %8 = vector.extract_strided_slice %4 {offsets = [0, 32], sizes = [8, 32], strides = [1, 1]} : vector<8x256xf32> to vector<8x32xf32>
    %9 = vector.extract_strided_slice %4 {offsets = [0, 64], sizes = [8, 32], strides = [1, 1]} : vector<8x256xf32> to vector<8x32xf32>
    %10 = vector.extract_strided_slice %4 {offsets = [0, 96], sizes = [8, 32], strides = [1, 1]} : vector<8x256xf32> to vector<8x32xf32>
    %11 = vector.extract_strided_slice %4 {offsets = [0, 128], sizes = [8, 32], strides = [1, 1]} : vector<8x256xf32> to vector<8x32xf32>
    %12 = vector.extract_strided_slice %4 {offsets = [0, 160], sizes = [8, 32], strides = [1, 1]} : vector<8x256xf32> to vector<8x32xf32>
    %13 = vector.extract_strided_slice %4 {offsets = [0, 192], sizes = [8, 32], strides = [1, 1]} : vector<8x256xf32> to vector<8x32xf32>
    %14 = vector.extract_strided_slice %4 {offsets = [0, 224], sizes = [8, 32], strides = [1, 1]} : vector<8x256xf32> to vector<8x32xf32>
    %15 = tpu.concatenate %7, %8, %9, %10, %11, %12, %13, %14 in 0 : vector<8x32xf32>, vector<8x32xf32>, vector<8x32xf32>, vector<8x32xf32>, vector<8x32xf32>, vector<8x32xf32>, vector<8x32xf32>, vector<8x32xf32> -> vector<64x32xf32>
    %16 = vector.extract_strided_slice %5 {offsets = [0, 0], sizes = [8, 32], strides = [1, 1]} : vector<8x256xf32> to vector<8x32xf32>
    %17 = vector.extract_strided_slice %5 {offsets = [0, 32], sizes = [8, 32], strides = [1, 1]} : vector<8x256xf32> to vector<8x32xf32>
    %18 = vector.extract_strided_slice %5 {offsets = [0, 64], sizes = [8, 32], strides = [1, 1]} : vector<8x256xf32> to vector<8x32xf32>
    %19 = vector.extract_strided_slice %5 {offsets = [0, 96], sizes = [8, 32], strides = [1, 1]} : vector<8x256xf32> to vector<8x32xf32>
    %20 = vector.extract_strided_slice %5 {offsets = [0, 128], sizes = [8, 32], strides = [1, 1]} : vector<8x256xf32> to vector<8x32xf32>
    %21 = vector.extract_strided_slice %5 {offsets = [0, 160], sizes = [8, 32], strides = [1, 1]} : vector<8x256xf32> to vector<8x32xf32>
    %22 = vector.extract_strided_slice %5 {offsets = [0, 192], sizes = [8, 32], strides = [1, 1]} : vector<8x256xf32> to vector<8x32xf32>
    %23 = vector.extract_strided_slice %5 {offsets = [0, 224], sizes = [8, 32], strides = [1, 1]} : vector<8x256xf32> to vector<8x32xf32>
    %24 = tpu.concatenate %16, %17, %18, %19, %20, %21, %22, %23 in 0 : vector<8x32xf32>, vector<8x32xf32>, vector<8x32xf32>, vector<8x32xf32>, vector<8x32xf32>, vector<8x32xf32>, vector<8x32xf32>, vector<8x32xf32> -> vector<64x32xf32>
    %cst_4 = arith.constant dense<0.000000e+00> : vector<32x32xf32>
    %25 = tpu.matmul %15, %24, %cst_4 {dimension_numbers = #tpu.dot_dimension_numbers<[0], [0], [1], [1], [0, 1, 1, 1], [], []>} : vector<64x32xf32>, vector<64x32xf32>, vector<32x32xf32> -> vector<32x32xf32>
    %cst_5 = arith.constant dense<0xFF800000> : vector<32xf32>
    %26 = vector.multi_reduction <maximumf>, %25, %cst_5 [1] : vector<32x32xf32> to vector<32xf32>
    %27 = vector.shape_cast %26 : vector<32xf32> to vector<32x1xf32>
    %28 = vector.broadcast %27 : vector<32x1xf32> to vector<32x32xf32>
    %29 = arith.subf %25, %28 : vector<32x32xf32>
    %30 = math.exp %29 : vector<32x32xf32>
    %cst_6 = arith.constant dense<0.000000e+00> : vector<32xf32>
    %31 = vector.multi_reduction <add>, %30, %cst_6 [1] : vector<32x32xf32> to vector<32xf32>
    %32 = vector.shape_cast %31 : vector<32xf32> to vector<32x1xf32>
    %33 = vector.broadcast %32 : vector<32x1xf32> to vector<32x32xf32>
    %34 = arith.divf %30, %33 : vector<32x32xf32>
    %c0_7 = arith.constant 0 : index
    %c0_8 = arith.constant 0 : index
    %35 = vector.load %arg3[%c0_7, %c0_8] : memref<64x8xf32, #tpu.memory_space<vmem>>, vector<64x8xf32>
    %cst_9 = arith.constant dense<0.000000e+00> : vector<64x256xf32>
    %36 = tpu.matmul %35, %6, %cst_9 {dimension_numbers = #tpu.dot_dimension_numbers<[1], [0], [0], [1], [0, 0, 1, 1], [], []>} : vector<64x8xf32>, vector<8x256xf32>, vector<64x256xf32> -> vector<64x256xf32>
    %37 = vector.extract_strided_slice %36 {offsets = [0, 0], sizes = [64, 32], strides = [1, 1]} : vector<64x256xf32> to vector<64x32xf32>
    %cst_10 = arith.constant dense<0.000000e+00> : vector<64x32xf32>
    %38 = tpu.matmul %37, %34, %cst_10 {dimension_numbers = #tpu.dot_dimension_numbers<[1], [0], [0], [1], [0, 0, 1, 1], [], []>} : vector<64x32xf32>, vector<32x32xf32>, vector<64x32xf32> -> vector<64x32xf32>
    %39 = vector.extract_strided_slice %36 {offsets = [0, 32], sizes = [64, 32], strides = [1, 1]} : vector<64x256xf32> to vector<64x32xf32>
    %cst_11 = arith.constant dense<0.000000e+00> : vector<64x32xf32>
    %40 = tpu.matmul %39, %34, %cst_11 {dimension_numbers = #tpu.dot_dimension_numbers<[1], [0], [0], [1], [0, 0, 1, 1], [], []>} : vector<64x32xf32>, vector<32x32xf32>, vector<64x32xf32> -> vector<64x32xf32>
    %41 = vector.extract_strided_slice %36 {offsets = [0, 64], sizes = [64, 32], strides = [1, 1]} : vector<64x256xf32> to vector<64x32xf32>
    %cst_12 = arith.constant dense<0.000000e+00> : vector<64x32xf32>
    %42 = tpu.matmul %41, %34, %cst_12 {dimension_numbers = #tpu.dot_dimension_numbers<[1], [0], [0], [1], [0, 0, 1, 1], [], []>} : vector<64x32xf32>, vector<32x32xf32>, vector<64x32xf32> -> vector<64x32xf32>
    %43 = vector.extract_strided_slice %36 {offsets = [0, 96], sizes = [64, 32], strides = [1, 1]} : vector<64x256xf32> to vector<64x32xf32>
    %cst_13 = arith.constant dense<0.000000e+00> : vector<64x32xf32>
    %44 = tpu.matmul %43, %34, %cst_13 {dimension_numbers = #tpu.dot_dimension_numbers<[1], [0], [0], [1], [0, 0, 1, 1], [], []>} : vector<64x32xf32>, vector<32x32xf32>, vector<64x32xf32> -> vector<64x32xf32>
    %45 = vector.extract_strided_slice %36 {offsets = [0, 128], sizes = [64, 32], strides = [1, 1]} : vector<64x256xf32> to vector<64x32xf32>
    %cst_14 = arith.constant dense<0.000000e+00> : vector<64x32xf32>
    %46 = tpu.matmul %45, %34, %cst_14 {dimension_numbers = #tpu.dot_dimension_numbers<[1], [0], [0], [1], [0, 0, 1, 1], [], []>} : vector<64x32xf32>, vector<32x32xf32>, vector<64x32xf32> -> vector<64x32xf32>
    %47 = vector.extract_strided_slice %36 {offsets = [0, 160], sizes = [64, 32], strides = [1, 1]} : vector<64x256xf32> to vector<64x32xf32>
    %cst_15 = arith.constant dense<0.000000e+00> : vector<64x32xf32>
    %48 = tpu.matmul %47, %34, %cst_15 {dimension_numbers = #tpu.dot_dimension_numbers<[1], [0], [0], [1], [0, 0, 1, 1], [], []>} : vector<64x32xf32>, vector<32x32xf32>, vector<64x32xf32> -> vector<64x32xf32>
    %49 = vector.extract_strided_slice %36 {offsets = [0, 192], sizes = [64, 32], strides = [1, 1]} : vector<64x256xf32> to vector<64x32xf32>
    %cst_16 = arith.constant dense<0.000000e+00> : vector<64x32xf32>
    %50 = tpu.matmul %49, %34, %cst_16 {dimension_numbers = #tpu.dot_dimension_numbers<[1], [0], [0], [1], [0, 0, 1, 1], [], []>} : vector<64x32xf32>, vector<32x32xf32>, vector<64x32xf32> -> vector<64x32xf32>
    %51 = vector.extract_strided_slice %36 {offsets = [0, 224], sizes = [64, 32], strides = [1, 1]} : vector<64x256xf32> to vector<64x32xf32>
    %cst_17 = arith.constant dense<0.000000e+00> : vector<64x32xf32>
    %52 = tpu.matmul %51, %34, %cst_17 {dimension_numbers = #tpu.dot_dimension_numbers<[1], [0], [0], [1], [0, 0, 1, 1], [], []>} : vector<64x32xf32>, vector<32x32xf32>, vector<64x32xf32> -> vector<64x32xf32>
    %53 = tpu.concatenate %38, %40, %42, %44, %46, %48, %50, %52 in 1 : vector<64x32xf32>, vector<64x32xf32>, vector<64x32xf32>, vector<64x32xf32>, vector<64x32xf32>, vector<64x32xf32>, vector<64x32xf32>, vector<64x32xf32> -> vector<64x256xf32>
    %c0_18 = arith.constant 0 : index
    %c0_19 = arith.constant 0 : index
    %c0_20 = arith.constant 0 : index
    %54 = vector.load %arg4[%c0_18, %c0_19, %c0_20] : memref<1x64x256xf32, #tpu.memory_space<vmem>>, vector<1x64x256xf32>
    %55 = vector.shape_cast %54 : vector<1x64x256xf32> to vector<64x256xf32>
    %56 = vector.shape_cast %53 : vector<64x256xf32> to vector<1x64x256xf32>
    tpu.vector_store %arg4[%c0_18, %c0_19, %c0_20], %56 {strides = array<i32>} : memref<1x64x256xf32, #tpu.memory_space<vmem>>, vector<1x64x256xf32>,
    return
  }
  func.func @transform_0(%arg0: i32) -> (i32, i32, i32) {
    %c0_i32 = arith.constant 0 : i32
    %c0_i32_0 = arith.constant 0 : i32
    %c0_i32_1 = arith.constant 0 : i32
    return %arg0, %c0_i32, %c0_i32_0 : i32, i32, i32
  }
  func.func @transform_1(%arg0: i32) -> (i32, i32) {
    %c0_i32 = arith.constant 0 : i32
    %c0_i32_0 = arith.constant 0 : i32
    %c0_i32_1 = arith.constant 0 : i32
    return %c0_i32, %c0_i32_0 : i32, i32
  }
  func.func @transform_2(%arg0: i32) -> (i32, i32) {
    %c0_i32 = arith.constant 0 : i32
    %c0_i32_0 = arith.constant 0 : i32
    %c0_i32_1 = arith.constant 0 : i32
    return %c0_i32, %c0_i32_0 : i32, i32
  }
  func.func @transform_3(%arg0: i32) -> (i32, i32, i32) {
    %c0_i32 = arith.constant 0 : i32
    %c0_i32_0 = arith.constant 0 : i32
    %c0_i32_1 = arith.constant 0 : i32
    return %arg0, %c0_i32, %c0_i32_0 : i32, i32, i32
  }
}

</mosaic_0001>

<llo_original>
// kernel: tpu_custom_call.1
$region0: #{tpu_custom_call.1}
  #allocation0 [shape = 'u32[]', space=smem, size = 0x4, offset = 0x4, fixed_abs, tag = 'smem constant byte address 0x4 - core index']
  #allocation1 [shape = 'u32[144,128]{1,0:T(1,128)}', space=vmem, size = 0x12000, scoped, tag = 'internal scratch']
  %s0 = inlined_call_operand.hbm [shape: f32[2,64,256], index: 0, kind: input, shape index: {}]
  %s1 = inlined_call_operand.vmem [shape: f32[24,64], index: 1, kind: input, shape index: {}]
  %s2 = inlined_call_operand.vmem [shape: f32[64,8], index: 2, kind: input, shape index: {}]
  %s3 = inlined_call_operand.hbm [shape: f32[2,64,256], index: 3, kind: output, shape index: {}]
  %s4 = sld [smem:[#allocation0]]
  $region49: #{tpu_custom_call.1} parent=0
    _
  %s6 = ssub.s32 1, %s4
  %s7 = scalar_select 0, %s6, %s4
  $region1: #{tpu_custom_call.1} parent=0
    #allocation2 [shape = 'u8[131072]{0}', space=vmem, size = 0x20000, scoped, tag = 'input window, operand 0']
    #allocation3 [shape = 's32[2]{0}', space=sflag, size = 0x8, scoped, tag = 'scoped memory for tpu_custom_call.1']
    #allocation4 [shape = 's32[2]{0}', space=sflag, size = 0x8, scoped, tag = 'scoped memory for tpu_custom_call.1']
    #allocation5 [shape = 'u8[131072]{0}', space=vmem, size = 0x20000, scoped, tag = 'output window, operand 0']
    %8 = vsyncpa [#allocation3], 0
    %s9 = scalar_lea.sflag [#allocation3], 1
    %10 = vsyncpa %s9, 0
    %11 = vsyncpa [#allocation4], 0
    %s12 = scalar_lea.sflag [#allocation4], 1
    %13 = vsyncpa %s12, 0
    loop: start=0, step=1, limit=4
    $region2: #{tpu_custom_call.1} parent=1 // loop_pre_header
      _
    $region3: #{tpu_custom_call.1} parent=1 // loop_header
      %s15 = sphi 0, %s19
      %p16 = scmp.ge.s32.totalorder %s15, 4
      %s25 = sphi 0, %s27
      %s28 = sphi 0, %s25
      %s29 = sphi 0, %s28
      %s45 = sphi 0, %s29
      %s49 = sphi 0, %s49
      %s51 = sphi 0, %s49
      %s52 = sphi 0, %s51
      %s66 = sphi 0, %s52
      %s70 = sphi 0, %s70
      %s72 = sphi 0, %s70
      %s73 = sphi 0, %s72
      %s87 = sphi 0, %s73
      %s93 = sphi 0, %s95
      %s96 = sphi 0, %s93
      %s97 = sphi 0, %s96
      %s113 = sphi 0, %s97
    $region4: #{tpu_custom_call.1} parent=1 // loop_header_branch
      %18 = sbr.rel (%p16) target = $region8
    $region5: #{tpu_custom_call.1} parent=1 // loop_body
      %s20 = ssub.s32 %s15, 1
      %s21 = ssub.s32 %s15, 2
      %s22 = sadd.s32 %s15, 1
      %s23 = ssub.s32 %s15, %s22
      %p24 = scmp.eq.s32.totalorder %s23, 0
      %s26 = sadd.s32 %s25, 1
      %s27 = scalar_select %p24, %s25, %s26
      %p30 = pneg %p24
      %p31 = scmp.eq.s32.totalorder %s15, 1
      %p32 = por %p30, %p31
      %p33 = scmp.ne.s32.totalorder %s25, %s28
      %p34 = scmp.eq.s32.totalorder %s15, 0
      %p35 = por %p33, %p34
      %p36 = scmp.ne.s32.totalorder %s25, %s28
      %p37 = scmp.eq.s32.totalorder %s20, 1
      %p38 = por %p36, %p37
      %p39 = scmp.ne.s32.totalorder %s28, %s29
      %p40 = scmp.eq.s32.totalorder %s20, 0
      %p41 = por %p39, %p40
      %p42 = scmp.ne.s32.totalorder %s28, %s29
      %p43 = scmp.eq.s32.totalorder %s21, 1
      %p44 = por %p42, %p43
      %p46 = scmp.ne.s32.totalorder %s29, %s45
      %p47 = scmp.eq.s32.totalorder %s21, 0
      %p48 = por %p46, %p47
      %s50 = sadd.s32 %s49, 1
      %p53 = scmp.eq.s32.totalorder %s15, 1
      %p54 = scmp.ne.s32.totalorder %s49, %s51
      %p55 = scmp.eq.s32.totalorder %s15, 0
      %p56 = por %p54, %p55
      %p57 = scmp.ne.s32.totalorder %s49, %s51
      %p58 = scmp.eq.s32.totalorder %s20, 1
      %p59 = por %p57, %p58
      %p60 = scmp.ne.s32.totalorder %s51, %s52
      %p61 = scmp.eq.s32.totalorder %s20, 0
      %p62 = por %p60, %p61
      %p63 = scmp.ne.s32.totalorder %s51, %s52
      %p64 = scmp.eq.s32.totalorder %s21, 1
      %p65 = por %p63, %p64
      %p67 = scmp.ne.s32.totalorder %s52, %s66
      %p68 = scmp.eq.s32.totalorder %s21, 0
      %p69 = por %p67, %p68
      %s71 = sadd.s32 %s70, 1
      %p74 = scmp.eq.s32.totalorder %s15, 1
      %p75 = scmp.ne.s32.totalorder %s70, %s72
      %p76 = scmp.eq.s32.totalorder %s15, 0
      %p77 = por %p75, %p76
      %p78 = scmp.ne.s32.totalorder %s70, %s72
      %p79 = scmp.eq.s32.totalorder %s20, 1
      %p80 = por %p78, %p79
      %p81 = scmp.ne.s32.totalorder %s72, %s73
      %p82 = scmp.eq.s32.totalorder %s20, 0
      %p83 = por %p81, %p82
      %p84 = scmp.ne.s32.totalorder %s72, %s73
      %p85 = scmp.eq.s32.totalorder %s21, 1
      %p86 = por %p84, %p85
      %p88 = scmp.ne.s32.totalorder %s73, %s87
      %p89 = scmp.eq.s32.totalorder %s21, 0
      %p90 = por %p88, %p89
      %s91 = ssub.s32 %s15, %s22
      %p92 = scmp.eq.s32.totalorder %s91, 0
      %s94 = sadd.s32 %s93, 1
      %s95 = scalar_select %p92, %s93, %s94
      %p98 = pneg %p92
      %p99 = scmp.eq.s32.totalorder %s15, 1
      %p100 = por %p98, %p99
      %p101 = scmp.ne.s32.totalorder %s93, %s96
      %p102 = scmp.eq.s32.totalorder %s15, 0
      %p103 = por %p101, %p102
      %p104 = scmp.ne.s32.totalorder %s93, %s96
      %p105 = scmp.eq.s32.totalorder %s20, 1
      %p106 = por %p104, %p105
      %p107 = scmp.ne.s32.totalorder %s96, %s97
      %p108 = scmp.eq.s32.totalorder %s20, 0
      %p109 = por %p107, %p108
      %p110 = scmp.ne.s32.totalorder %s96, %s97
      %p111 = scmp.eq.s32.totalorder %s21, 1
      %p112 = por %p110, %p111
      %p114 = scmp.ne.s32.totalorder %s97, %s113
      %p115 = scmp.eq.s32.totalorder %s21, 0
      %p116 = por %p114, %p115
      %p117 = scmp.le.s32.totalorder 1, %s15
      %p118 = scmp.lt.s32.totalorder %s15, 3
      %p119 = pnand %p117, %p118
      %p120 = pneg %p119
      // Predicated region
      $region9: #{tpu_custom_call.1} parent=5 // pred_check
        _
      $region10: #{tpu_custom_call.1} parent=5 // pred_check_branch
        %122 = sbr.rel (%p119) target = $region12
      $region11: #{tpu_custom_call.1} parent=5 // pred_region
        %s123 = ssub.s32 %s15, 1
        // Predicated region
        $region13: #{tpu_custom_call.1} parent=11 // pred_check
          %p124 = pneg %p62
        $region14: #{tpu_custom_call.1} parent=11 // pred_check_branch
          %126 = sbr.rel (%p124) target = $region16
        $region15: #{tpu_custom_call.1} parent=11 // pred_region
          _
        $region16: #{tpu_custom_call.1} parent=11 // pred_fallthru
          _
        // Predicated region
        $region17: #{tpu_custom_call.1} parent=11 // pred_check
          %p127 = pneg %p83
        $region18: #{tpu_custom_call.1} parent=11 // pred_check_branch
          %129 = sbr.rel (%p127) target = $region20
        $region19: #{tpu_custom_call.1} parent=11 // pred_region
          _
        $region20: #{tpu_custom_call.1} parent=11 // pred_fallthru
          _
      $region12: #{tpu_custom_call.1} parent=5 // pred_fallthru
        _
      %p130 = scmp.lt.s32.totalorder %s15, 2
      // Predicated region
      $region21: #{tpu_custom_call.1} parent=5 // pred_check
        %p131 = pneg %p130
      $region22: #{tpu_custom_call.1} parent=5 // pred_check_branch
        %133 = sbr.rel (%p131) target = $region24
      $region23: #{tpu_custom_call.1} parent=5 // pred_region
        // Predicated region
        $region25: #{tpu_custom_call.1} parent=23 // pred_check
          %p134 = pneg %p35
        $region26: #{tpu_custom_call.1} parent=23 // pred_check_branch
          %136 = sbr.rel (%p134) target = $region28
        $region27: #{tpu_custom_call.1} parent=23 // pred_region
          %s137 = sand.u32 %s25, 1
          %s138 = scalar_lea.sflag [#allocation3], %s137
          %s139 = sand.u32 %s25, 1
          %s140 = smul.addr %s139, 128
          %s141 = scalar_lea.vmem [#allocation2], %s140
          %s143 = ssub.s32 2048, 2048
          %144 = vsyncadd %s138, %s143
          %s145 = smul.addr %s15, 16
          %s146 = smul.addr %s145, 128
          %s147 = scalar_lea.hbm %s0, %s146
          %s148 = sshll.u32 %s141, 4
          %s149 = int_to_ptr.vmem [resolvable:$true] %s148
          %154 = dma.hbm_to_vmem [thread:$0]  %s147, 2048, %s149, %s138, 256, 256, 16
        $region28: #{tpu_custom_call.1} parent=23 // pred_fallthru
          _
      $region24: #{tpu_custom_call.1} parent=5 // pred_fallthru
        _
      %p155 = scmp.le.s32.totalorder 1, %s15
      %p156 = scmp.lt.s32.totalorder %s15, 3
      %p157 = pnand %p155, %p156
      %p158 = pneg %p157
      // Predicated region
      $region29: #{tpu_custom_call.1} parent=5 // pred_check
        _
      $region30: #{tpu_custom_call.1} parent=5 // pred_check_branch
        %160 = sbr.rel (%p157) target = $region32
      $region31: #{tpu_custom_call.1} parent=5 // pred_region
        %s161 = ssub.s32 %s15, 1
        %s162 = sand.u32 %s28, 1
        %s163 = scalar_lea.sflag [#allocation3], %s162
        %s164 = sand.u32 %s28, 1
        %s165 = smul.addr %s164, 128
        %s166 = scalar_lea.vmem [#allocation2], %s165
        // Predicated region
        $region33: #{tpu_custom_call.1} parent=31 // pred_check
          %p167 = pneg %p41
        $region34: #{tpu_custom_call.1} parent=31 // pred_check_branch
          %169 = sbr.rel (%p167) target = $region36
        $region35: #{tpu_custom_call.1} parent=31 // pred_region
          %170 = dma.done %s163, 2048
        $region36: #{tpu_custom_call.1} parent=31 // pred_fallthru
          _
        %s171 = sand.u32 %s28, 1
        %s172 = scalar_lea.sflag [#allocation3], %s171
        %s173 = sand.u32 %s28, 1
        %s174 = smul.addr %s173, 128
        %s175 = scalar_lea.vmem [#allocation2], %s174
        %p176 = pneg %p41
        %p177 = pneg %p38
        %p178 = pneg %p62
        %p179 = pneg %p59
        %p180 = pneg %p83
        %p181 = pneg %p80
        %p182 = pneg %p109
        %p183 = pneg %p106
        %s184 = sand.u32 %s96, 1
        %s185 = scalar_lea.sflag [#allocation4], %s184
        %s186 = sand.u32 %s96, 1
        %s187 = smul.addr %s186, 128
        %s188 = scalar_lea.vmem [#allocation5], %s187
        %v189 = vld [vmem:[%s166] sm:$0xff]
        %v190 = vld [vmem:[%s166 + $0x8] sm:$0xff]
        %v191 = vld [vmem:[%s166 + $0x10] sm:$0xff]
        %v192 = vld [vmem:[%s166 + $0x18] sm:$0xff]
        %v193 = vld [vmem:[%s166 + $0x20] sm:$0xff]
        %v194 = vld [vmem:[%s166 + $0x28] sm:$0xff]
        %v195 = vld [vmem:[%s166 + $0x30] sm:$0xff]
        %v196 = vld [vmem:[%s166 + $0x38] sm:$0xff]
        %v197 = vld [vmem:[%s166 + $0x40] sm:$0xff]
        %v198 = vld [vmem:[%s166 + $0x48] sm:$0xff]
        %v199 = vld [vmem:[%s166 + $0x50] sm:$0xff]
        %v200 = vld [vmem:[%s166 + $0x58] sm:$0xff]
        %v201 = vld [vmem:[%s166 + $0x60] sm:$0xff]
        %v202 = vld [vmem:[%s166 + $0x68] sm:$0xff]
        %v203 = vld [vmem:[%s166 + $0x70] sm:$0xff]
        %v204 = vld [vmem:[%s166 + $0x78] sm:$0xff]
        %v205 = vld [vmem:[%s1] sm:$0xff]
        %v206 = vld [vmem:[%s1 + $0x8] sm:$0xff]
        %v207 = vld [vmem:[%s1 + $0x10] sm:$0xff]
        %vm208 = vcmask 523264
        %v210 = vsel %vm208, %v205, 0
        %v213 = vsel %vm208, %v206, 0
        %v216 = vsel %vm208, %v207, 0
        %218 = vmatprep.subr.mxu0 %v190
        %219 = vmatpush1.msra.mxu0 %v189
        %220 = vmatprep.subr.mxu0 %v192
        %221 = vmatpush1.msra.mxu0 %v191
        %222 = vmatprep.subr.mxu0 %v194
        %223 = vmatpush1.msra.mxu0 %v193
        %224 = vmatprep.subr.mxu0 %v196
        %225 = vmatpush1.msra.mxu0 %v195
        %226 = vmatprep.subr.mxu0 %v198
        %227 = vmatpush1.msra.mxu0 %v197
        %228 = vmatprep.subr.mxu0 %v200
        %229 = vmatpush1.msra.mxu0 %v199
        %230 = vmatprep.subr.mxu0 %v202
        %231 = vmatpush1.msra.mxu0 %v201
        %232 = vmatprep.subr.mxu0 %v204
        %233 = vmatpush1.msra.mxu0 %v203
        %234 = vmatprep.subr.mxu0 0.0
        %235 = vmatpush1.msra.mxu0 0.0
        %236 = vmatprep.subr.mxu0 0.0
        %237 = vmatpush1.msra.mxu0 0.0
        %238 = vmatprep.subr.mxu0 0.0
        %239 = vmatpush1.msra.mxu0 0.0
        %240 = vmatprep.subr.mxu0 0.0
        %241 = vmatpush1.msra.mxu0 0.0
        %242 = vmatprep.subr.mxu0 0.0
        %243 = vmatpush1.msra.mxu0 0.0
        %244 = vmatprep.subr.mxu0 0.0
        %245 = vmatpush1.msra.mxu0 0.0
        %246 = vmatprep.subr.mxu0 0.0
        %247 = vmatpush1.msra.mxu0 0.0
        %248 = vmatprep.subr.mxu0 0.0
        %249 = vmatpush1.msra.mxu0 0.0
        %250 = vmatprep.subr.mxu0 0.0
        %251 = vmatpush1.msra.mxu0 0.0
        %252 = vmatprep.subr.mxu0 0.0
        %253 = vmatpush1.msra.mxu0 0.0
        %254 = vmatprep.subr.mxu0 0.0
        %255 = vmatpush1.msra.mxu0 0.0
        %256 = vmatprep.subr.mxu0 0.0
        %257 = vmatpush1.msra.mxu0 0.0
        %258 = vmatprep.subr.mxu0 0.0
        %259 = vmatpush1.msra.mxu0 0.0
        %260 = vmatprep.subr.mxu0 0.0
        %261 = vmatpush1.msra.mxu0 0.0
        %262 = vmatprep.subr.mxu0 0.0
        %263 = vmatpush1.msra.mxu0 0.0
        %264 = vmatprep.subr.mxu0 0.0
        %265 = vmatpush1.msra.mxu0 0.0
        %266 = vmatprep.subr.mxu0 0.0
        %267 = vmatpush1.msra.mxu0 0.0
        %268 = vmatprep.subr.mxu0 0.0
        %269 = vmatpush1.msra.mxu0 0.0
        %270 = vmatprep.subr.mxu0 0.0
        %271 = vmatpush1.msra.mxu0 0.0
        %272 = vmatprep.subr.mxu0 0.0
        %273 = vmatpush1.msra.mxu0 0.0
        %274 = vmatprep.subr.mxu0 0.0
        %275 = vmatpush1.msra.mxu0 0.0
        %276 = vmatprep.subr.mxu0 0.0
        %277 = vmatpush1.msra.mxu0 0.0
        %278 = vmatprep.subr.mxu0 0.0
        %279 = vmatpush1.msra.mxu0 0.0
        %280 = vmatprep.subr.mxu0 0.0
        %281 = vmatpush1.msra.mxu0 0.0
        %282 = vmatprep.mubr.f32.mxu0 0.0
        %283 = vmatmul.mubr.f32.gmra.mrb[0].mxu0 %v210
        %v284 = vpop.f32.mrb[0].mxu0
        %v285 = vadd.f32 0.0, %v284
        %v286 = vpop.f32.mrb[0].mxu0
        %v287 = vadd.f32 0.0, %v286
        %288 = vmatprep.mubr.f32.mxu0 0.0
        %289 = vmatmul.mubr.f32.gmra.mrb[0].mxu0 %v213
        %v290 = vpop.f32.mrb[0].mxu0
        %v291 = vadd.f32 0.0, %v290
        %v292 = vpop.f32.mrb[0].mxu0
        %v293 = vadd.f32 0.0, %v292
        %294 = vmatprep.mubr.f32.mxu0 0.0
        %295 = vmatmul.mubr.f32.gmra.mrb[0].mxu0 %v216
        %v296 = vpop.f32.mrb[0].mxu0
        %v297 = vadd.f32 0.0, %v296
        %v298 = vpop.f32.mrb[0].mxu0
        %v299 = vadd.f32 0.0, %v298
        %300 = vdwg.mxu0
        %302 = vrot.lane.b32.xlu0 %v285, 96
        %v303 = vpop.permute.xlu0 %302
        %305 = vrot.lane.b32.xlu0 %v285, 64
        %v306 = vpop.permute.xlu0 %305
        %308 = vrot.lane.b32.xlu0 %v285, 32
        %v309 = vpop.permute.xlu0 %308
        %312 = vrot.lane.b32.xlu0 %v287, 96
        %v313 = vpop.permute.xlu0 %312
        %315 = vrot.lane.b32.xlu0 %v287, 64
        %v316 = vpop.permute.xlu0 %315
        %318 = vrot.lane.b32.xlu0 %v287, 32
        %v319 = vpop.permute.xlu0 %318
        %322 = vrot.lane.b32.xlu0 %v291, 96
        %v323 = vpop.permute.xlu0 %322
        %325 = vrot.lane.b32.xlu0 %v291, 64
        %v326 = vpop.permute.xlu0 %325
        %328 = vrot.lane.b32.xlu0 %v291, 32
        %v329 = vpop.permute.xlu0 %328
        %332 = vrot.lane.b32.xlu0 %v293, 96
        %v333 = vpop.permute.xlu0 %332
        %335 = vrot.lane.b32.xlu0 %v293, 64
        %v336 = vpop.permute.xlu0 %335
        %338 = vrot.lane.b32.xlu0 %v293, 32
        %v339 = vpop.permute.xlu0 %338
        %341 = vxpose.xlu0.b32.start [1/16] %v285, 128
        %342 = vxpose.xlu0.b32.cont [2/16] %v303, 128
        %343 = vxpose.xlu0.b32.cont [3/16] %v306, 128
        %344 = vxpose.xlu0.b32.cont [4/16] %v309, 128
        %345 = vxpose.xlu0.b32.cont [5/16] %v287, 128
        %346 = vxpose.xlu0.b32.cont [6/16] %v313, 128
        %347 = vxpose.xlu0.b32.cont [7/16] %v316, 128
        %348 = vxpose.xlu0.b32.cont [8/16] %v319, 128
        %349 = vxpose.xlu0.b32.cont [9/16] 0.0, 128
        %350 = vxpose.xlu0.b32.cont [10/16] 0.0, 128
        %351 = vxpose.xlu0.b32.cont [11/16] 0.0, 128
        %352 = vxpose.xlu0.b32.cont [12/16] 0.0, 128
        %353 = vxpose.xlu0.b32.cont [13/16] 0.0, 128
        %354 = vxpose.xlu0.b32.cont [14/16] 0.0, 128
        %355 = vxpose.xlu0.b32.cont [15/16] 0.0, 128
        %356 = vxpose.xlu0.b32.end [16/16] 0.0, 128
        %v357 = vpop.trf.xlu0
        %v358 = vpop.trf.xlu0
        %v359 = vpop.trf.xlu0
        %v360 = vpop.trf.xlu0
        %v361 = vpop.trf.xlu0
        %v362 = vpop.trf.xlu0
        %v363 = vpop.trf.xlu0
        %v364 = vpop.trf.xlu0
        %v365 = vpop.trf.xlu0
        %v366 = vpop.trf.xlu0
        %v367 = vpop.trf.xlu0
        %v368 = vpop.trf.xlu0
        %v369 = vpop.trf.xlu0
        %v370 = vpop.trf.xlu0
        %v371 = vpop.trf.xlu0
        %v372 = vpop.trf.xlu0
        %v374 = vsel %vm208, %v357, 0
        %v377 = vsel %vm208, %v358, 0
        %v380 = vsel %vm208, %v359, 0
        %v383 = vsel %vm208, %v360, 0
        %385 = vmatprep.subr.mxu0 0.0
        %386 = vmatpush1.msra.mxu0 %v291
        %387 = vmatprep.subr.mxu0 0.0
        %388 = vmatpush1.msra.mxu0 %v323
        %389 = vmatprep.subr.mxu0 0.0
        %390 = vmatpush1.msra.mxu0 %v326
        %391 = vmatprep.subr.mxu0 0.0
        %392 = vmatpush1.msra.mxu0 %v329
        %393 = vmatprep.subr.mxu0 0.0
        %394 = vmatpush1.msra.mxu0 %v293
        %395 = vmatprep.subr.mxu0 0.0
        %396 = vmatpush1.msra.mxu0 %v333
        %397 = vmatprep.subr.mxu0 0.0
        %398 = vmatpush1.msra.mxu0 %v336
        %399 = vmatprep.subr.mxu0 0.0
        %400 = vmatpush1.msra.mxu0 %v339
        %401 = vmatprep.subr.mxu0 0.0
        %402 = vmatpush1.msra.mxu0 0.0
        %403 = vmatprep.subr.mxu0 0.0
        %404 = vmatpush1.msra.mxu0 0.0
        %405 = vmatprep.subr.mxu0 0.0
        %406 = vmatpush1.msra.mxu0 0.0
        %407 = vmatprep.subr.mxu0 0.0
        %408 = vmatpush1.msra.mxu0 0.0
        %409 = vmatprep.subr.mxu0 0.0
        %410 = vmatpush1.msra.mxu0 0.0
        %411 = vmatprep.subr.mxu0 0.0
        %412 = vmatpush1.msra.mxu0 0.0
        %413 = vmatprep.subr.mxu0 0.0
        %414 = vmatpush1.msra.mxu0 0.0
        %415 = vmatprep.subr.mxu0 0.0
        %416 = vmatpush1.msra.mxu0 0.0
        %417 = vmatprep.subr.mxu0 0.0
        %418 = vmatpush1.msra.mxu0 0.0
        %419 = vmatprep.subr.mxu0 0.0
        %420 = vmatpush1.msra.mxu0 0.0
        %421 = vmatprep.subr.mxu0 0.0
        %422 = vmatpush1.msra.mxu0 0.0
        %423 = vmatprep.subr.mxu0 0.0
        %424 = vmatpush1.msra.mxu0 0.0
        %425 = vmatprep.subr.mxu0 0.0
        %426 = vmatpush1.msra.mxu0 0.0
        %427 = vmatprep.subr.mxu0 0.0
        %428 = vmatpush1.msra.mxu0 0.0
        %429 = vmatprep.subr.mxu0 0.0
        %430 = vmatpush1.msra.mxu0 0.0
        %431 = vmatprep.subr.mxu0 0.0
        %432 = vmatpush1.msra.mxu0 0.0
        %433 = vmatprep.subr.mxu0 0.0
        %434 = vmatpush1.msra.mxu0 0.0
        %435 = vmatprep.subr.mxu0 0.0
        %436 = vmatpush1.msra.mxu0 0.0
        %437 = vmatprep.subr.mxu0 0.0
        %438 = vmatpush1.msra.mxu0 0.0
        %439 = vmatprep.subr.mxu0 0.0
        %440 = vmatpush1.msra.mxu0 0.0
        %441 = vmatprep.subr.mxu0 0.0
        %442 = vmatpush1.msra.mxu0 0.0
        %443 = vmatprep.subr.mxu0 0.0
        %444 = vmatpush1.msra.mxu0 0.0
        %445 = vmatprep.subr.mxu0 0.0
        %446 = vmatpush1.msra.mxu0 0.0
        %447 = vmatprep.subr.mxu0 0.0
        %448 = vmatpush1.msra.mxu0 0.0
        %449 = vmatprep.mubr.f32.mxu0 0.0
        %450 = vmatmul.mubr.f32.gmra.mrb[0].mxu0 %v374
        %v451 = vpop.f32.mrb[0].mxu0
        %v452 = vadd.f32 0.0, %v451
        %v453 = vpop.f32.mrb[0].mxu0
        %454 = vmatprep.mubr.f32.mxu0 0.0
        %455 = vmatmul.mubr.f32.gmra.mrb[0].mxu0 %v377
        %v456 = vpop.f32.mrb[0].mxu0
        %v457 = vadd.f32 0.0, %v456
        %v458 = vpop.f32.mrb[0].mxu0
        %459 = vmatprep.mubr.f32.mxu0 0.0
        %460 = vmatmul.mubr.f32.gmra.mrb[0].mxu0 %v380
        %v461 = vpop.f32.mrb[0].mxu0
        %v462 = vadd.f32 0.0, %v461
        %v463 = vpop.f32.mrb[0].mxu0
        %464 = vmatprep.mubr.f32.mxu0 0.0
        %465 = vmatmul.mubr.f32.gmra.mrb[0].mxu0 %v383
        %v466 = vpop.f32.mrb[0].mxu0
        %v467 = vadd.f32 0.0, %v466
        %v468 = vpop.f32.mrb[0].mxu0
        %469 = vdwg.mxu0
        %vm470 = vcmask 261120
        %v471 = vsel %vm470, %v452, -inf
        %472 = vmax.xlane.f32.xlu0 %v471
        %v473 = vpop.xlane.xlu0 %472
        %v474 = vsel %vm470, %v457, -inf
        %475 = vmax.xlane.f32.xlu0 %v474
        %v476 = vpop.xlane.xlu0 %475
        %v477 = vsel %vm470, %v462, -inf
        %478 = vmax.xlane.f32.xlu0 %v477
        %v479 = vpop.xlane.xlu0 %478
        %v480 = vsel %vm470, %v467, -inf
        %481 = vmax.xlane.f32.xlu0 %v480
        %v482 = vpop.xlane.xlu0 %481
        %v483 = vsub.f32 %v452, %v473
        %v484 = vsub.f32 %v457, %v476
        %v485 = vsub.f32 %v462, %v479
        %v486 = vsub.f32 %v467, %v482
        %v487 = vmul.f32 %v483, 1.442695
        %v488 = vpow.pop %v487
        %v489 = vmul.f32 %v484, 1.442695
        %v490 = vpow.pop %v489
        %v491 = vmul.f32 %v485, 1.442695
        %v492 = vpow.pop %v491
        %v493 = vmul.f32 %v486, 1.442695
        %v494 = vpow.pop %v493
        %v495 = vsel %vm470, %v488, 0.0
        %496 = vadd.xlane.f32.xlu0 %v495
        %v497 = vpop.xlane.xlu0 %496
        %v498 = vsel %vm470, %v490, 0.0
        %499 = vadd.xlane.f32.xlu0 %v498
        %v500 = vpop.xlane.xlu0 %499
        %v501 = vsel %vm470, %v492, 0.0
        %502 = vadd.xlane.f32.xlu0 %v501
        %v503 = vpop.xlane.xlu0 %502
        %v504 = vsel %vm470, %v494, 0.0
        %505 = vadd.xlane.f32.xlu0 %v504
        %v506 = vpop.xlane.xlu0 %505
        %v507 = vrcp.pop %v497
        %v508 = vmul.f32 %v488, %v507
        %v509 = vrcp.pop %v500
        %v510 = vmul.f32 %v490, %v509
        %v511 = vrcp.pop %v503
        %v512 = vmul.f32 %v492, %v511
        %v513 = vrcp.pop %v506
        %v514 = vmul.f32 %v494, %v513
        %v515 = vld [vmem:[%s2] sm:$0xff]
        %v516 = vld [vmem:[%s2 + $0x8] sm:$0xff]
        %v517 = vld [vmem:[%s2 + $0x10] sm:$0xff]
        %v518 = vld [vmem:[%s2 + $0x18] sm:$0xff]
        %v519 = vld [vmem:[%s2 + $0x20] sm:$0xff]
        %v520 = vld [vmem:[%s2 + $0x28] sm:$0xff]
        %v521 = vld [vmem:[%s2 + $0x30] sm:$0xff]
        %v522 = vld [vmem:[%s2 + $0x38] sm:$0xff]
        %vm523 = vcmask 64512
        %v525 = vsel %vm523, %v515, 0
        %v528 = vsel %vm523, %v516, 0
        %v531 = vsel %vm523, %v517, 0
        %v534 = vsel %vm523, %v518, 0
        %v537 = vsel %vm523, %v519, 0
        %v540 = vsel %vm523, %v520, 0
        %v543 = vsel %vm523, %v521, 0
        %v546 = vsel %vm523, %v522, 0
        %548 = vmatprep.subr.mxu0 %v299
        %549 = vmatpush1.msra.mxu0 %v297
        %550 = vmatprep.subr.mxu0 0.0
        %551 = vmatpush1.msra.mxu0 0.0
        %552 = vmatprep.subr.mxu0 0.0
        %553 = vmatpush1.msra.mxu0 0.0
        %554 = vmatprep.subr.mxu0 0.0
        %555 = vmatpush1.msra.mxu0 0.0
        %556 = vmatprep.subr.mxu0 0.0
        %557 = vmatpush1.msra.mxu0 0.0
        %558 = vmatprep.subr.mxu0 0.0
        %559 = vmatpush1.msra.mxu0 0.0
        %560 = vmatprep.subr.mxu0 0.0
        %561 = vmatpush1.msra.mxu0 0.0
        %562 = vmatprep.subr.mxu0 0.0
        %563 = vmatpush1.msra.mxu0 0.0
        %564 = vmatprep.subr.mxu0 0.0
        %565 = vmatpush1.msra.mxu0 0.0
        %566 = vmatprep.subr.mxu0 0.0
        %567 = vmatpush1.msra.mxu0 0.0
        %568 = vmatprep.subr.mxu0 0.0
        %569 = vmatpush1.msra.mxu0 0.0
        %570 = vmatprep.subr.mxu0 0.0
        %571 = vmatpush1.msra.mxu0 0.0
        %572 = vmatprep.subr.mxu0 0.0
        %573 = vmatpush1.msra.mxu0 0.0
        %574 = vmatprep.subr.mxu0 0.0
        %575 = vmatpush1.msra.mxu0 0.0
        %576 = vmatprep.subr.mxu0 0.0
        %577 = vmatpush1.msra.mxu0 0.0
        %578 = vmatprep.subr.mxu0 0.0
        %579 = vmatpush1.msra.mxu0 0.0
        %580 = vmatprep.subr.mxu0 0.0
        %581 = vmatpush1.msra.mxu0 0.0
        %582 = vmatprep.subr.mxu0 0.0
        %583 = vmatpush1.msra.mxu0 0.0
        %584 = vmatprep.subr.mxu0 0.0
        %585 = vmatpush1.msra.mxu0 0.0
        %586 = vmatprep.subr.mxu0 0.0
        %587 = vmatpush1.msra.mxu0 0.0
        %588 = vmatprep.subr.mxu0 0.0
        %589 = vmatpush1.msra.mxu0 0.0
        %590 = vmatprep.subr.mxu0 0.0
        %591 = vmatpush1.msra.mxu0 0.0
        %592 = vmatprep.subr.mxu0 0.0
        %593 = vmatpush1.msra.mxu0 0.0
        %594 = vmatprep.subr.mxu0 0.0
        %595 = vmatpush1.msra.mxu0 0.0
        %596 = vmatprep.subr.mxu0 0.0
        %597 = vmatpush1.msra.mxu0 0.0
        %598 = vmatprep.subr.mxu0 0.0
        %599 = vmatpush1.msra.mxu0 0.0
        %600 = vmatprep.subr.mxu0 0.0
        %601 = vmatpush1.msra.mxu0 0.0
        %602 = vmatprep.subr.mxu0 0.0
        %603 = vmatpush1.msra.mxu0 0.0
        %604 = vmatprep.subr.mxu0 0.0
        %605 = vmatpush1.msra.mxu0 0.0
        %606 = vmatprep.subr.mxu0 0.0
        %607 = vmatpush1.msra.mxu0 0.0
        %608 = vmatprep.subr.mxu0 0.0
        %609 = vmatpush1.msra.mxu0 0.0
        %610 = vmatprep.subr.mxu0 0.0
        %611 = vmatpush1.msra.mxu0 0.0
        %612 = vmatprep.mubr.f32.mxu0 0.0
        %613 = vmatmul.mubr.f32.gmra.mrb[0].mxu0 %v525
        %v614 = vpop.f32.mrb[0].mxu0
        %v615 = vadd.f32 0.0, %v614
        %v616 = vpop.f32.mrb[0].mxu0
        %v617 = vadd.f32 0.0, %v616
        %618 = vmatprep.mubr.f32.mxu0 0.0
        %619 = vmatmul.mubr.f32.gmra.mrb[0].mxu0 %v528
        %v620 = vpop.f32.mrb[0].mxu0
        %v621 = vadd.f32 0.0, %v620
        %v622 = vpop.f32.mrb[0].mxu0
        %v623 = vadd.f32 0.0, %v622
        %624 = vmatprep.mubr.f32.mxu0 0.0
        %625 = vmatmul.mubr.f32.gmra.mrb[0].mxu0 %v531
        %v626 = vpop.f32.mrb[0].mxu0
        %v627 = vadd.f32 0.0, %v626
        %v628 = vpop.f32.mrb[0].mxu0
        %v629 = vadd.f32 0.0, %v628
        %630 = vmatprep.mubr.f32.mxu0 0.0
        %631 = vmatmul.mubr.f32.gmra.mrb[0].mxu0 %v534
        %v632 = vpop.f32.mrb[0].mxu0
        %v633 = vadd.f32 0.0, %v632
        %v634 = vpop.f32.mrb[0].mxu0
        %v635 = vadd.f32 0.0, %v634
        %636 = vmatprep.mubr.f32.mxu0 0.0
        %637 = vmatmul.mubr.f32.gmra.mrb[0].mxu0 %v537
        %v638 = vpop.f32.mrb[0].mxu0
        %v639 = vadd.f32 0.0, %v638
        %v640 = vpop.f32.mrb[0].mxu0
        %v641 = vadd.f32 0.0, %v640
        %642 = vmatprep.mubr.f32.mxu0 0.0
        %643 = vmatmul.mubr.f32.gmra.mrb[0].mxu0 %v540
        %v644 = vpop.f32.mrb[0].mxu0
        %v645 = vadd.f32 0.0, %v644
        %v646 = vpop.f32.mrb[0].mxu0
        %v647 = vadd.f32 0.0, %v646
        %648 = vmatprep.mubr.f32.mxu0 0.0
        %649 = vmatmul.mubr.f32.gmra.mrb[0].mxu0 %v543
        %v650 = vpop.f32.mrb[0].mxu0
        %v651 = vadd.f32 0.0, %v650
        %v652 = vpop.f32.mrb[0].mxu0
        %v653 = vadd.f32 0.0, %v652
        %654 = vmatprep.mubr.f32.mxu0 0.0
        %655 = vmatmul.mubr.f32.gmra.mrb[0].mxu0 %v546
        %v656 = vpop.f32.mrb[0].mxu0
        %v657 = vadd.f32 0.0, %v656
        %v658 = vpop.f32.mrb[0].mxu0
        %v659 = vadd.f32 0.0, %v658
        %660 = vdwg.mxu0
        %v662 = vsel %vm470, %v615, 0
        %v665 = vsel %vm470, %v621, 0
        %v668 = vsel %vm470, %v627, 0
        %v671 = vsel %vm470, %v633, 0
        %v674 = vsel %vm470, %v639, 0
        %v677 = vsel %vm470, %v645, 0
        %v680 = vsel %vm470, %v651, 0
        %v683 = vsel %vm470, %v657, 0
        %685 = vmatprep.subr.mxu0 0.0
        %686 = vmatpush1.msra.mxu0 %v508
        %687 = vmatprep.subr.mxu0 0.0
        %688 = vmatpush1.msra.mxu0 %v510
        %689 = vmatprep.subr.mxu0 0.0
        %690 = vmatpush1.msra.mxu0 %v512
        %691 = vmatprep.subr.mxu0 0.0
        %692 = vmatpush1.msra.mxu0 %v514
        %693 = vmatprep.subr.mxu0 0.0
        %694 = vmatpush1.msra.mxu0 0.0
        %695 = vmatprep.subr.mxu0 0.0
        %696 = vmatpush1.msra.mxu0 0.0
        %697 = vmatprep.subr.mxu0 0.0
        %698 = vmatpush1.msra.mxu0 0.0
        %699 = vmatprep.subr.mxu0 0.0
        %700 = vmatpush1.msra.mxu0 0.0
        %701 = vmatprep.subr.mxu0 0.0
        %702 = vmatpush1.msra.mxu0 0.0
        %703 = vmatprep.subr.mxu0 0.0
        %704 = vmatpush1.msra.mxu0 0.0
        %705 = vmatprep.subr.mxu0 0.0
        %706 = vmatpush1.msra.mxu0 0.0
        %707 = vmatprep.subr.mxu0 0.0
        %708 = vmatpush1.msra.mxu0 0.0
        %709 = vmatprep.subr.mxu0 0.0
        %710 = vmatpush1.msra.mxu0 0.0
        %711 = vmatprep.subr.mxu0 0.0
        %712 = vmatpush1.msra.mxu0 0.0
        %713 = vmatprep.subr.mxu0 0.0
        %714 = vmatpush1.msra.mxu0 0.0
        %715 = vmatprep.subr.mxu0 0.0
        %716 = vmatpush1.msra.mxu0 0.0
        %717 = vmatprep.subr.mxu0 0.0
        %718 = vmatpush1.msra.mxu0 0.0
        %719 = vmatprep.subr.mxu0 0.0
        %720 = vmatpush1.msra.mxu0 0.0
        %721 = vmatprep.subr.mxu0 0.0
        %722 = vmatpush1.msra.mxu0 0.0
        %723 = vmatprep.subr.mxu0 0.0
        %724 = vmatpush1.msra.mxu0 0.0
        %725 = vmatprep.subr.mxu0 0.0
        %726 = vmatpush1.msra.mxu0 0.0
        %727 = vmatprep.subr.mxu0 0.0
        %728 = vmatpush1.msra.mxu0 0.0
        %729 = vmatprep.subr.mxu0 0.0
        %730 = vmatpush1.msra.mxu0 0.0
        %731 = vmatprep.subr.mxu0 0.0
        %732 = vmatpush1.msra.mxu0 0.0
        %733 = vmatprep.subr.mxu0 0.0
        %734 = vmatpush1.msra.mxu0 0.0
        %735 = vmatprep.subr.mxu0 0.0
        %736 = vmatpush1.msra.mxu0 0.0
        %737 = vmatprep.subr.mxu0 0.0
        %738 = vmatpush1.msra.mxu0 0.0
        %739 = vmatprep.subr.mxu0 0.0
        %740 = vmatpush1.msra.mxu0 0.0
        %741 = vmatprep.subr.mxu0 0.0
        %742 = vmatpush1.msra.mxu0 0.0
        %743 = vmatprep.subr.mxu0 0.0
        %744 = vmatpush1.msra.mxu0 0.0
        %745 = vmatprep.subr.mxu0 0.0
        %746 = vmatpush1.msra.mxu0 0.0
        %747 = vmatprep.subr.mxu0 0.0
        %748 = vmatpush1.msra.mxu0 0.0
        %749 = vmatprep.mubr.f32.mxu0 0.0
        %750 = vmatmul.mubr.f32.gmra.mrb[0].mxu0 %v662
        %v751 = vpop.f32.mrb[0].mxu0
        %v752 = vadd.f32 0.0, %v751
        %v753 = vpop.f32.mrb[0].mxu0
        %754 = vmatprep.mubr.f32.mxu0 0.0
        %755 = vmatmul.mubr.f32.gmra.mrb[0].mxu0 %v665
        %v756 = vpop.f32.mrb[0].mxu0
        %v757 = vadd.f32 0.0, %v756
        %v758 = vpop.f32.mrb[0].mxu0
        %759 = vmatprep.mubr.f32.mxu0 0.0
        %760 = vmatmul.mubr.f32.gmra.mrb[0].mxu0 %v668
        %v761 = vpop.f32.mrb[0].mxu0
        %v762 = vadd.f32 0.0, %v761
        %v763 = vpop.f32.mrb[0].mxu0
        %764 = vmatprep.mubr.f32.mxu0 0.0
        %765 = vmatmul.mubr.f32.gmra.mrb[0].mxu0 %v671
        %v766 = vpop.f32.mrb[0].mxu0
        %v767 = vadd.f32 0.0, %v766
        %v768 = vpop.f32.mrb[0].mxu0
        %769 = vmatprep.mubr.f32.mxu0 0.0
        %770 = vmatmul.mubr.f32.gmra.mrb[0].mxu0 %v674
        %v771 = vpop.f32.mrb[0].mxu0
        %v772 = vadd.f32 0.0, %v771
        %v773 = vpop.f32.mrb[0].mxu0
        %774 = vmatprep.mubr.f32.mxu0 0.0
        %775 = vmatmul.mubr.f32.gmra.mrb[0].mxu0 %v677
        %v776 = vpop.f32.mrb[0].mxu0
        %v777 = vadd.f32 0.0, %v776
        %v778 = vpop.f32.mrb[0].mxu0
        %779 = vmatprep.mubr.f32.mxu0 0.0
        %780 = vmatmul.mubr.f32.gmra.mrb[0].mxu0 %v680
        %v781 = vpop.f32.mrb[0].mxu0
        %v782 = vadd.f32 0.0, %v781
        %v783 = vpop.f32.mrb[0].mxu0
        %784 = vmatprep.mubr.f32.mxu0 0.0
        %785 = vmatmul.mubr.f32.gmra.mrb[0].mxu0 %v683
        %v786 = vpop.f32.mrb[0].mxu0
        %v787 = vadd.f32 0.0, %v786
        %v788 = vpop.f32.mrb[0].mxu0
        %789 = vdwg.mxu0
        %790 = vrot.lane.b32.xlu0 %v615, 96
        %v791 = vpop.permute.xlu0 %790
        %792 = vrot.lane.b32.xlu0 %v621, 96
        %v793 = vpop.permute.xlu0 %792
        %794 = vrot.lane.b32.xlu0 %v627, 96
        %v795 = vpop.permute.xlu0 %794
        %796 = vrot.lane.b32.xlu0 %v633, 96
        %v797 = vpop.permute.xlu0 %796
        %798 = vrot.lane.b32.xlu0 %v639, 96
        %v799 = vpop.permute.xlu0 %798
        %800 = vrot.lane.b32.xlu0 %v645, 96
        %v801 = vpop.permute.xlu0 %800
        %802 = vrot.lane.b32.xlu0 %v651, 96
        %v803 = vpop.permute.xlu0 %802
        %804 = vrot.lane.b32.xlu0 %v657, 96
        %v805 = vpop.permute.xlu0 %804
        %v806 = vsel %vm470, %v791, 0
        %v808 = vsel %vm470, %v793, 0
        %v810 = vsel %vm470, %v795, 0
        %v812 = vsel %vm470, %v797, 0
        %v814 = vsel %vm470, %v799, 0
        %v816 = vsel %vm470, %v801, 0
        %v818 = vsel %vm470, %v803, 0
        %v820 = vsel %vm470, %v805, 0
        %822 = vmatprep.subr.mxu0 0.0
        %823 = vmatpush1.msra.mxu0 %v508
        %824 = vmatprep.subr.mxu0 0.0
        %825 = vmatpush1.msra.mxu0 %v510
        %826 = vmatprep.subr.mxu0 0.0
        %827 = vmatpush1.msra.mxu0 %v512
        %828 = vmatprep.subr.mxu0 0.0
        %829 = vmatpush1.msra.mxu0 %v514
        %830 = vmatprep.subr.mxu0 0.0
        %831 = vmatpush1.msra.mxu0 0.0
        %832 = vmatprep.subr.mxu0 0.0
        %833 = vmatpush1.msra.mxu0 0.0
        %834 = vmatprep.subr.mxu0 0.0
        %835 = vmatpush1.msra.mxu0 0.0
        %836 = vmatprep.subr.mxu0 0.0
        %837 = vmatpush1.msra.mxu0 0.0
        %838 = vmatprep.subr.mxu0 0.0
        %839 = vmatpush1.msra.mxu0 0.0
        %840 = vmatprep.subr.mxu0 0.0
        %841 = vmatpush1.msra.mxu0 0.0
        %842 = vmatprep.subr.mxu0 0.0
        %843 = vmatpush1.msra.mxu0 0.0
        %844 = vmatprep.subr.mxu0 0.0
        %845 = vmatpush1.msra.mxu0 0.0
        %846 = vmatprep.subr.mxu0 0.0
        %847 = vmatpush1.msra.mxu0 0.0
        %848 = vmatprep.subr.mxu0 0.0
        %849 = vmatpush1.msra.mxu0 0.0
        %850 = vmatprep.subr.mxu0 0.0
        %851 = vmatpush1.msra.mxu0 0.0
        %852 = vmatprep.subr.mxu0 0.0
        %853 = vmatpush1.msra.mxu0 0.0
        %854 = vmatprep.subr.mxu0 0.0
        %855 = vmatpush1.msra.mxu0 0.0
        %856 = vmatprep.subr.mxu0 0.0
        %857 = vmatpush1.msra.mxu0 0.0
        %858 = vmatprep.subr.mxu0 0.0
        %859 = vmatpush1.msra.mxu0 0.0
        %860 = vmatprep.subr.mxu0 0.0
        %861 = vmatpush1.msra.mxu0 0.0
        %862 = vmatprep.subr.mxu0 0.0
        %863 = vmatpush1.msra.mxu0 0.0
        %864 = vmatprep.subr.mxu0 0.0
        %865 = vmatpush1.msra.mxu0 0.0
        %866 = vmatprep.subr.mxu0 0.0
        %867 = vmatpush1.msra.mxu0 0.0
        %868 = vmatprep.subr.mxu0 0.0
        %869 = vmatpush1.msra.mxu0 0.0
        %870 = vmatprep.subr.mxu0 0.0
        %871 = vmatpush1.msra.mxu0 0.0
        %872 = vmatprep.subr.mxu0 0.0
        %873 = vmatpush1.msra.mxu0 0.0
        %874 = vmatprep.subr.mxu0 0.0
        %875 = vmatpush1.msra.mxu0 0.0
        %876 = vmatprep.subr.mxu0 0.0
        %877 = vmatpush1.msra.mxu0 0.0
        %878 = vmatprep.subr.mxu0 0.0
        %879 = vmatpush1.msra.mxu0 0.0
        %880 = vmatprep.subr.mxu0 0.0
        %881 = vmatpush1.msra.mxu0 0.0
        %882 = vmatprep.subr.mxu0 0.0
        %883 = vmatpush1.msra.mxu0 0.0
        %884 = vmatprep.subr.mxu0 0.0
        %885 = vmatpush1.msra.mxu0 0.0
        %886 = vmatprep.mubr.f32.mxu0 0.0
        %887 = vmatmul.mubr.f32.gmra.mrb[0].mxu0 %v806
        %v888 = vpop.f32.mrb[0].mxu0
        %v889 = vadd.f32 0.0, %v888
        %v890 = vpop.f32.mrb[0].mxu0
        %891 = vmatprep.mubr.f32.mxu0 0.0
        %892 = vmatmul.mubr.f32.gmra.mrb[0].mxu0 %v808
        %v893 = vpop.f32.mrb[0].mxu0
        %v894 = vadd.f32 0.0, %v893
        %v895 = vpop.f32.mrb[0].mxu0
        %896 = vmatprep.mubr.f32.mxu0 0.0
        %897 = vmatmul.mubr.f32.gmra.mrb[0].mxu0 %v810
        %v898 = vpop.f32.mrb[0].mxu0
        %v899 = vadd.f32 0.0, %v898
        %v900 = vpop.f32.mrb[0].mxu0
        %901 = vmatprep.mubr.f32.mxu0 0.0
        %902 = vmatmul.mubr.f32.gmra.mrb[0].mxu0 %v812
        %v903 = vpop.f32.mrb[0].mxu0
        %v904 = vadd.f32 0.0, %v903
        %v905 = vpop.f32.mrb[0].mxu0
        %906 = vmatprep.mubr.f32.mxu0 0.0
        %907 = vmatmul.mubr.f32.gmra.mrb[0].mxu0 %v814
        %v908 = vpop.f32.mrb[0].mxu0
        %v909 = vadd.f32 0.0, %v908
        %v910 = vpop.f32.mrb[0].mxu0
        %911 = vmatprep.mubr.f32.mxu0 0.0
        %912 = vmatmul.mubr.f32.gmra.mrb[0].mxu0 %v816
        %v913 = vpop.f32.mrb[0].mxu0
        %v914 = vadd.f32 0.0, %v913
        %v915 = vpop.f32.mrb[0].mxu0
        %916 = vmatprep.mubr.f32.mxu0 0.0
        %917 = vmatmul.mubr.f32.gmra.mrb[0].mxu0 %v818
        %v918 = vpop.f32.mrb[0].mxu0
        %v919 = vadd.f32 0.0, %v918
        %v920 = vpop.f32.mrb[0].mxu0
        %921 = vmatprep.mubr.f32.mxu0 0.0
        %922 = vmatmul.mubr.f32.gmra.mrb[0].mxu0 %v820
        %v923 = vpop.f32.mrb[0].mxu0
        %v924 = vadd.f32 0.0, %v923
        %v925 = vpop.f32.mrb[0].mxu0
        %926 = vdwg.mxu0
        %927 = vrot.lane.b32.xlu0 %v615, 64
        %v928 = vpop.permute.xlu0 %927
        %929 = vrot.lane.b32.xlu0 %v621, 64
        %v930 = vpop.permute.xlu0 %929
        %931 = vrot.lane.b32.xlu0 %v627, 64
        %v932 = vpop.permute.xlu0 %931
        %933 = vrot.lane.b32.xlu0 %v633, 64
        %v934 = vpop.permute.xlu0 %933
        %935 = vrot.lane.b32.xlu0 %v639, 64
        %v936 = vpop.permute.xlu0 %935
        %937 = vrot.lane.b32.xlu0 %v645, 64
        %v938 = vpop.permute.xlu0 %937
        %939 = vrot.lane.b32.xlu0 %v651, 64
        %v940 = vpop.permute.xlu0 %939
        %941 = vrot.lane.b32.xlu0 %v657, 64
        %v942 = vpop.permute.xlu0 %941
        %v943 = vsel %vm470, %v928, 0
        %v945 = vsel %vm470, %v930, 0
        %v947 = vsel %vm470, %v932, 0
        %v949 = vsel %vm470, %v934, 0
        %v951 = vsel %vm470, %v936, 0
        %v953 = vsel %vm470, %v938, 0
        %v955 = vsel %vm470, %v940, 0
        %v957 = vsel %vm470, %v942, 0
        %959 = vmatprep.subr.mxu0 0.0
        %960 = vmatpush1.msra.mxu0 %v508
        %961 = vmatprep.subr.mxu0 0.0
        %962 = vmatpush1.msra.mxu0 %v510
        %963 = vmatprep.subr.mxu0 0.0
        %964 = vmatpush1.msra.mxu0 %v512
        %965 = vmatprep.subr.mxu0 0.0
        %966 = vmatpush1.msra.mxu0 %v514
        %967 = vmatprep.subr.mxu0 0.0
        %968 = vmatpush1.msra.mxu0 0.0
        %969 = vmatprep.subr.mxu0 0.0
        %970 = vmatpush1.msra.mxu0 0.0
        %971 = vmatprep.subr.mxu0 0.0
        %972 = vmatpush1.msra.mxu0 0.0
        %973 = vmatprep.subr.mxu0 0.0
        %974 = vmatpush1.msra.mxu0 0.0
        %975 = vmatprep.subr.mxu0 0.0
        %976 = vmatpush1.msra.mxu0 0.0
        %977 = vmatprep.subr.mxu0 0.0
        %978 = vmatpush1.msra.mxu0 0.0
        %979 = vmatprep.subr.mxu0 0.0
        %980 = vmatpush1.msra.mxu0 0.0
        %981 = vmatprep.subr.mxu0 0.0
        %982 = vmatpush1.msra.mxu0 0.0
        %983 = vmatprep.subr.mxu0 0.0
        %984 = vmatpush1.msra.mxu0 0.0
        %985 = vmatprep.subr.mxu0 0.0
        %986 = vmatpush1.msra.mxu0 0.0
        %987 = vmatprep.subr.mxu0 0.0
        %988 = vmatpush1.msra.mxu0 0.0
        %989 = vmatprep.subr.mxu0 0.0
        %990 = vmatpush1.msra.mxu0 0.0
        %991 = vmatprep.subr.mxu0 0.0
        %992 = vmatpush1.msra.mxu0 0.0
        %993 = vmatprep.subr.mxu0 0.0
        %994 = vmatpush1.msra.mxu0 0.0
        %995 = vmatprep.subr.mxu0 0.0
        %996 = vmatpush1.msra.mxu0 0.0
        %997 = vmatprep.subr.mxu0 0.0
        %998 = vmatpush1.msra.mxu0 0.0
        %999 = vmatprep.subr.mxu0 0.0
        %1000 = vmatpush1.msra.mxu0 0.0
        %1001 = vmatprep.subr.mxu0 0.0
        %1002 = vmatpush1.msra.mxu0 0.0
        %1003 = vmatprep.subr.mxu0 0.0
        %1004 = vmatpush1.msra.mxu0 0.0
        %1005 = vmatprep.subr.mxu0 0.0
        %1006 = vmatpush1.msra.mxu0 0.0
        %1007 = vmatprep.subr.mxu0 0.0
        %1008 = vmatpush1.msra.mxu0 0.0
        %1009 = vmatprep.subr.mxu0 0.0
        %1010 = vmatpush1.msra.mxu0 0.0
        %1011 = vmatprep.subr.mxu0 0.0
        %1012 = vmatpush1.msra.mxu0 0.0
        %1013 = vmatprep.subr.mxu0 0.0
        %1014 = vmatpush1.msra.mxu0 0.0
        %1015 = vmatprep.subr.mxu0 0.0
        %1016 = vmatpush1.msra.mxu0 0.0
        %1017 = vmatprep.subr.mxu0 0.0
        %1018 = vmatpush1.msra.mxu0 0.0
        %1019 = vmatprep.subr.mxu0 0.0
        %1020 = vmatpush1.msra.mxu0 0.0
        %1021 = vmatprep.subr.mxu0 0.0
        %1022 = vmatpush1.msra.mxu0 0.0
        %1023 = vmatprep.mubr.f32.mxu0 0.0
        %1024 = vmatmul.mubr.f32.gmra.mrb[0].mxu0 %v943
        %v1025 = vpop.f32.mrb[0].mxu0
        %v1026 = vadd.f32 0.0, %v1025
        %v1027 = vpop.f32.mrb[0].mxu0
        %1028 = vmatprep.mubr.f32.mxu0 0.0
        %1029 = vmatmul.mubr.f32.gmra.mrb[0].mxu0 %v945
        %v1030 = vpop.f32.mrb[0].mxu0
        %v1031 = vadd.f32 0.0, %v1030
        %v1032 = vpop.f32.mrb[0].mxu0
        %1033 = vmatprep.mubr.f32.mxu0 0.0
        %1034 = vmatmul.mubr.f32.gmra.mrb[0].mxu0 %v947
        %v1035 = vpop.f32.mrb[0].mxu0
        %v1036 = vadd.f32 0.0, %v1035
        %v1037 = vpop.f32.mrb[0].mxu0
        %1038 = vmatprep.mubr.f32.mxu0 0.0
        %1039 = vmatmul.mubr.f32.gmra.mrb[0].mxu0 %v949
        %v1040 = vpop.f32.mrb[0].mxu0
        %v1041 = vadd.f32 0.0, %v1040
        %v1042 = vpop.f32.mrb[0].mxu0
        %1043 = vmatprep.mubr.f32.mxu0 0.0
        %1044 = vmatmul.mubr.f32.gmra.mrb[0].mxu0 %v951
        %v1045 = vpop.f32.mrb[0].mxu0
        %v1046 = vadd.f32 0.0, %v1045
        %v1047 = vpop.f32.mrb[0].mxu0
        %1048 = vmatprep.mubr.f32.mxu0 0.0
        %1049 = vmatmul.mubr.f32.gmra.mrb[0].mxu0 %v953
        %v1050 = vpop.f32.mrb[0].mxu0
        %v1051 = vadd.f32 0.0, %v1050
        %v1052 = vpop.f32.mrb[0].mxu0
        %1053 = vmatprep.mubr.f32.mxu0 0.0
        %1054 = vmatmul.mubr.f32.gmra.mrb[0].mxu0 %v955
        %v1055 = vpop.f32.mrb[0].mxu0
        %v1056 = vadd.f32 0.0, %v1055
        %v1057 = vpop.f32.mrb[0].mxu0
        %1058 = vmatprep.mubr.f32.mxu0 0.0
        %1059 = vmatmul.mubr.f32.gmra.mrb[0].mxu0 %v957
        %v1060 = vpop.f32.mrb[0].mxu0
        %v1061 = vadd.f32 0.0, %v1060
        %v1062 = vpop.f32.mrb[0].mxu0
        %1063 = vdwg.mxu0
        %1064 = vrot.lane.b32.xlu0 %v615, 32
        %v1065 = vpop.permute.xlu0 %1064
        %1066 = vrot.lane.b32.xlu0 %v621, 32
        %v1067 = vpop.permute.xlu0 %1066
        %1068 = vrot.lane.b32.xlu0 %v627, 32
        %v1069 = vpop.permute.xlu0 %1068
        %1070 = vrot.lane.b32.xlu0 %v633, 32
        %v1071 = vpop.permute.xlu0 %1070
        %1072 = vrot.lane.b32.xlu0 %v639, 32
        %v1073 = vpop.permute.xlu0 %1072
        %1074 = vrot.lane.b32.xlu0 %v645, 32
        %v1075 = vpop.permute.xlu0 %1074
        %1076 = vrot.lane.b32.xlu0 %v651, 32
        %v1077 = vpop.permute.xlu0 %1076
        %1078 = vrot.lane.b32.xlu0 %v657, 32
        %v1079 = vpop.permute.xlu0 %1078
        %v1080 = vsel %vm470, %v1065, 0
        %v1082 = vsel %vm470, %v1067, 0
        %v1084 = vsel %vm470, %v1069, 0
        %v1086 = vsel %vm470, %v1071, 0
        %v1088 = vsel %vm470, %v1073, 0
        %v1090 = vsel %vm470, %v1075, 0
        %v1092 = vsel %vm470, %v1077, 0
        %v1094 = vsel %vm470, %v1079, 0
        %1096 = vmatprep.subr.mxu0 0.0
        %1097 = vmatpush1.msra.mxu0 %v508
        %1098 = vmatprep.subr.mxu0 0.0
        %1099 = vmatpush1.msra.mxu0 %v510
        %1100 = vmatprep.subr.mxu0 0.0
        %1101 = vmatpush1.msra.mxu0 %v512
        %1102 = vmatprep.subr.mxu0 0.0
        %1103 = vmatpush1.msra.mxu0 %v514
        %1104 = vmatprep.subr.mxu0 0.0
        %1105 = vmatpush1.msra.mxu0 0.0
        %1106 = vmatprep.subr.mxu0 0.0
        %1107 = vmatpush1.msra.mxu0 0.0
        %1108 = vmatprep.subr.mxu0 0.0
        %1109 = vmatpush1.msra.mxu0 0.0
        %1110 = vmatprep.subr.mxu0 0.0
        %1111 = vmatpush1.msra.mxu0 0.0
        %1112 = vmatprep.subr.mxu0 0.0
        %1113 = vmatpush1.msra.mxu0 0.0
        %1114 = vmatprep.subr.mxu0 0.0
        %1115 = vmatpush1.msra.mxu0 0.0
        %1116 = vmatprep.subr.mxu0 0.0
        %1117 = vmatpush1.msra.mxu0 0.0
        %1118 = vmatprep.subr.mxu0 0.0
        %1119 = vmatpush1.msra.mxu0 0.0
        %1120 = vmatprep.subr.mxu0 0.0
        %1121 = vmatpush1.msra.mxu0 0.0
        %1122 = vmatprep.subr.mxu0 0.0
        %1123 = vmatpush1.msra.mxu0 0.0
        %1124 = vmatprep.subr.mxu0 0.0
        %1125 = vmatpush1.msra.mxu0 0.0
        %1126 = vmatprep.subr.mxu0 0.0
        %1127 = vmatpush1.msra.mxu0 0.0
        %1128 = vmatprep.subr.mxu0 0.0
        %1129 = vmatpush1.msra.mxu0 0.0
        %1130 = vmatprep.subr.mxu0 0.0
        %1131 = vmatpush1.msra.mxu0 0.0
        %1132 = vmatprep.subr.mxu0 0.0
        %1133 = vmatpush1.msra.mxu0 0.0
        %1134 = vmatprep.subr.mxu0 0.0
        %1135 = vmatpush1.msra.mxu0 0.0
        %1136 = vmatprep.subr.mxu0 0.0
        %1137 = vmatpush1.msra.mxu0 0.0
        %1138 = vmatprep.subr.mxu0 0.0
        %1139 = vmatpush1.msra.mxu0 0.0
        %1140 = vmatprep.subr.mxu0 0.0
        %1141 = vmatpush1.msra.mxu0 0.0
        %1142 = vmatprep.subr.mxu0 0.0
        %1143 = vmatpush1.msra.mxu0 0.0
        %1144 = vmatprep.subr.mxu0 0.0
        %1145 = vmatpush1.msra.mxu0 0.0
        %1146 = vmatprep.subr.mxu0 0.0
        %1147 = vmatpush1.msra.mxu0 0.0
        %1148 = vmatprep.subr.mxu0 0.0
        %1149 = vmatpush1.msra.mxu0 0.0
        %1150 = vmatprep.subr.mxu0 0.0
        %1151 = vmatpush1.msra.mxu0 0.0
        %1152 = vmatprep.subr.mxu0 0.0
        %1153 = vmatpush1.msra.mxu0 0.0
        %1154 = vmatprep.subr.mxu0 0.0
        %1155 = vmatpush1.msra.mxu0 0.0
        %1156 = vmatprep.subr.mxu0 0.0
        %1157 = vmatpush1.msra.mxu0 0.0
        %1158 = vmatprep.subr.mxu0 0.0
        %1159 = vmatpush1.msra.mxu0 0.0
        %1160 = vmatprep.mubr.f32.mxu0 0.0
        %1161 = vmatmul.mubr.f32.gmra.mrb[0].mxu0 %v1080
        %v1162 = vpop.f32.mrb[0].mxu0
        %v1163 = vadd.f32 0.0, %v1162
        %v1164 = vpop.f32.mrb[0].mxu0
        %1165 = vmatprep.mubr.f32.mxu0 0.0
        %1166 = vmatmul.mubr.f32.gmra.mrb[0].mxu0 %v1082
        %v1167 = vpop.f32.mrb[0].mxu0
        %v1168 = vadd.f32 0.0, %v1167
        %v1169 = vpop.f32.mrb[0].mxu0
        %1170 = vmatprep.mubr.f32.mxu0 0.0
        %1171 = vmatmul.mubr.f32.gmra.mrb[0].mxu0 %v1084
        %v1172 = vpop.f32.mrb[0].mxu0
        %v1173 = vadd.f32 0.0, %v1172
        %v1174 = vpop.f32.mrb[0].mxu0
        %1175 = vmatprep.mubr.f32.mxu0 0.0
        %1176 = vmatmul.mubr.f32.gmra.mrb[0].mxu0 %v1086
        %v1177 = vpop.f32.mrb[0].mxu0
        %v1178 = vadd.f32 0.0, %v1177
        %v1179 = vpop.f32.mrb[0].mxu0
        %1180 = vmatprep.mubr.f32.mxu0 0.0
        %1181 = vmatmul.mubr.f32.gmra.mrb[0].mxu0 %v1088
        %v1182 = vpop.f32.mrb[0].mxu0
        %v1183 = vadd.f32 0.0, %v1182
        %v1184 = vpop.f32.mrb[0].mxu0
        %1185 = vmatprep.mubr.f32.mxu0 0.0
        %1186 = vmatmul.mubr.f32.gmra.mrb[0].mxu0 %v1090
        %v1187 = vpop.f32.mrb[0].mxu0
        %v1188 = vadd.f32 0.0, %v1187
        %v1189 = vpop.f32.mrb[0].mxu0
        %1190 = vmatprep.mubr.f32.mxu0 0.0
        %1191 = vmatmul.mubr.f32.gmra.mrb[0].mxu0 %v1092
        %v1192 = vpop.f32.mrb[0].mxu0
        %v1193 = vadd.f32 0.0, %v1192
        %v1194 = vpop.f32.mrb[0].mxu0
        %1195 = vmatprep.mubr.f32.mxu0 0.0
        %1196 = vmatmul.mubr.f32.gmra.mrb[0].mxu0 %v1094
        %v1197 = vpop.f32.mrb[0].mxu0
        %v1198 = vadd.f32 0.0, %v1197
        %v1199 = vpop.f32.mrb[0].mxu0
        %1200 = vdwg.mxu0
        %v1202 = vsel %vm470, %v617, 0
        %v1205 = vsel %vm470, %v623, 0
        %v1208 = vsel %vm470, %v629, 0
        %v1211 = vsel %vm470, %v635, 0
        %v1214 = vsel %vm470, %v641, 0
        %v1217 = vsel %vm470, %v647, 0
        %v1220 = vsel %vm470, %v653, 0
        %v1223 = vsel %vm470, %v659, 0
        %1225 = vmatprep.subr.mxu0 0.0
        %1226 = vmatpush1.msra.mxu0 %v508
        %1227 = vmatprep.subr.mxu0 0.0
        %1228 = vmatpush1.msra.mxu0 %v510
        %1229 = vmatprep.subr.mxu0 0.0
        %1230 = vmatpush1.msra.mxu0 %v512
        %1231 = vmatprep.subr.mxu0 0.0
        %1232 = vmatpush1.msra.mxu0 %v514
        %1233 = vmatprep.subr.mxu0 0.0
        %1234 = vmatpush1.msra.mxu0 0.0
        %1235 = vmatprep.subr.mxu0 0.0
        %1236 = vmatpush1.msra.mxu0 0.0
        %1237 = vmatprep.subr.mxu0 0.0
        %1238 = vmatpush1.msra.mxu0 0.0
        %1239 = vmatprep.subr.mxu0 0.0
        %1240 = vmatpush1.msra.mxu0 0.0
        %1241 = vmatprep.subr.mxu0 0.0
        %1242 = vmatpush1.msra.mxu0 0.0
        %1243 = vmatprep.subr.mxu0 0.0
        %1244 = vmatpush1.msra.mxu0 0.0
        %1245 = vmatprep.subr.mxu0 0.0
        %1246 = vmatpush1.msra.mxu0 0.0
        %1247 = vmatprep.subr.mxu0 0.0
        %1248 = vmatpush1.msra.mxu0 0.0
        %1249 = vmatprep.subr.mxu0 0.0
        %1250 = vmatpush1.msra.mxu0 0.0
        %1251 = vmatprep.subr.mxu0 0.0
        %1252 = vmatpush1.msra.mxu0 0.0
        %1253 = vmatprep.subr.mxu0 0.0
        %1254 = vmatpush1.msra.mxu0 0.0
        %1255 = vmatprep.subr.mxu0 0.0
        %1256 = vmatpush1.msra.mxu0 0.0
        %1257 = vmatprep.subr.mxu0 0.0
        %1258 = vmatpush1.msra.mxu0 0.0
        %1259 = vmatprep.subr.mxu0 0.0
        %1260 = vmatpush1.msra.mxu0 0.0
        %1261 = vmatprep.subr.mxu0 0.0
        %1262 = vmatpush1.msra.mxu0 0.0
        %1263 = vmatprep.subr.mxu0 0.0
        %1264 = vmatpush1.msra.mxu0 0.0
        %1265 = vmatprep.subr.mxu0 0.0
        %1266 = vmatpush1.msra.mxu0 0.0
        %1267 = vmatprep.subr.mxu0 0.0
        %1268 = vmatpush1.msra.mxu0 0.0
        %1269 = vmatprep.subr.mxu0 0.0
        %1270 = vmatpush1.msra.mxu0 0.0
        %1271 = vmatprep.subr.mxu0 0.0
        %1272 = vmatpush1.msra.mxu0 0.0
        %1273 = vmatprep.subr.mxu0 0.0
        %1274 = vmatpush1.msra.mxu0 0.0
        %1275 = vmatprep.subr.mxu0 0.0
        %1276 = vmatpush1.msra.mxu0 0.0
        %1277 = vmatprep.subr.mxu0 0.0
        %1278 = vmatpush1.msra.mxu0 0.0
        %1279 = vmatprep.subr.mxu0 0.0
        %1280 = vmatpush1.msra.mxu0 0.0
        %1281 = vmatprep.subr.mxu0 0.0
        %1282 = vmatpush1.msra.mxu0 0.0
        %1283 = vmatprep.subr.mxu0 0.0
        %1284 = vmatpush1.msra.mxu0 0.0
        %1285 = vmatprep.subr.mxu0 0.0
        %1286 = vmatpush1.msra.mxu0 0.0
        %1287 = vmatprep.subr.mxu0 0.0
        %1288 = vmatpush1.msra.mxu0 0.0
        %1289 = vmatprep.mubr.f32.mxu0 0.0
        %1290 = vmatmul.mubr.f32.gmra.mrb[0].mxu0 %v1202
        %v1291 = vpop.f32.mrb[0].mxu0
        %v1292 = vadd.f32 0.0, %v1291
        %v1293 = vpop.f32.mrb[0].mxu0
        %1294 = vmatprep.mubr.f32.mxu0 0.0
        %1295 = vmatmul.mubr.f32.gmra.mrb[0].mxu0 %v1205
        %v1296 = vpop.f32.mrb[0].mxu0
        %v1297 = vadd.f32 0.0, %v1296
        %v1298 = vpop.f32.mrb[0].mxu0
        %1299 = vmatprep.mubr.f32.mxu0 0.0
        %1300 = vmatmul.mubr.f32.gmra.mrb[0].mxu0 %v1208
        %v1301 = vpop.f32.mrb[0].mxu0
        %v1302 = vadd.f32 0.0, %v1301
        %v1303 = vpop.f32.mrb[0].mxu0
        %1304 = vmatprep.mubr.f32.mxu0 0.0
        %1305 = vmatmul.mubr.f32.gmra.mrb[0].mxu0 %v1211
        %v1306 = vpop.f32.mrb[0].mxu0
        %v1307 = vadd.f32 0.0, %v1306
        %v1308 = vpop.f32.mrb[0].mxu0
        %1309 = vmatprep.mubr.f32.mxu0 0.0
        %1310 = vmatmul.mubr.f32.gmra.mrb[0].mxu0 %v1214
        %v1311 = vpop.f32.mrb[0].mxu0
        %v1312 = vadd.f32 0.0, %v1311
        %v1313 = vpop.f32.mrb[0].mxu0
        %1314 = vmatprep.mubr.f32.mxu0 0.0
        %1315 = vmatmul.mubr.f32.gmra.mrb[0].mxu0 %v1217
        %v1316 = vpop.f32.mrb[0].mxu0
        %v1317 = vadd.f32 0.0, %v1316
        %v1318 = vpop.f32.mrb[0].mxu0
        %1319 = vmatprep.mubr.f32.mxu0 0.0
        %1320 = vmatmul.mubr.f32.gmra.mrb[0].mxu0 %v1220
        %v1321 = vpop.f32.mrb[0].mxu0
        %v1322 = vadd.f32 0.0, %v1321
        %v1323 = vpop.f32.mrb[0].mxu0
        %1324 = vmatprep.mubr.f32.mxu0 0.0
        %1325 = vmatmul.mubr.f32.gmra.mrb[0].mxu0 %v1223
        %v1326 = vpop.f32.mrb[0].mxu0
        %v1327 = vadd.f32 0.0, %v1326
        %v1328 = vpop.f32.mrb[0].mxu0
        %1329 = vdwg.mxu0
        %1330 = vrot.lane.b32.xlu0 %v617, 96
        %v1331 = vpop.permute.xlu0 %1330
        %1332 = vrot.lane.b32.xlu0 %v623, 96
        %v1333 = vpop.permute.xlu0 %1332
        %1334 = vrot.lane.b32.xlu0 %v629, 96
        %v1335 = vpop.permute.xlu0 %1334
        %1336 = vrot.lane.b32.xlu0 %v635, 96
        %v1337 = vpop.permute.xlu0 %1336
        %1338 = vrot.lane.b32.xlu0 %v641, 96
        %v1339 = vpop.permute.xlu0 %1338
        %1340 = vrot.lane.b32.xlu0 %v647, 96
        %v1341 = vpop.permute.xlu0 %1340
        %1342 = vrot.lane.b32.xlu0 %v653, 96
        %v1343 = vpop.permute.xlu0 %1342
        %1344 = vrot.lane.b32.xlu0 %v659, 96
        %v1345 = vpop.permute.xlu0 %1344
        %v1346 = vsel %vm470, %v1331, 0
        %v1348 = vsel %vm470, %v1333, 0
        %v1350 = vsel %vm470, %v1335, 0
        %v1352 = vsel %vm470, %v1337, 0
        %v1354 = vsel %vm470, %v1339, 0
        %v1356 = vsel %vm470, %v1341, 0
        %v1358 = vsel %vm470, %v1343, 0
        %v1360 = vsel %vm470, %v1345, 0
        %1362 = vmatprep.subr.mxu0 0.0
        %1363 = vmatpush1.msra.mxu0 %v508
        %1364 = vmatprep.subr.mxu0 0.0
        %1365 = vmatpush1.msra.mxu0 %v510
        %1366 = vmatprep.subr.mxu0 0.0
        %1367 = vmatpush1.msra.mxu0 %v512
        %1368 = vmatprep.subr.mxu0 0.0
        %1369 = vmatpush1.msra.mxu0 %v514
        %1370 = vmatprep.subr.mxu0 0.0
        %1371 = vmatpush1.msra.mxu0 0.0
        %1372 = vmatprep.subr.mxu0 0.0
        %1373 = vmatpush1.msra.mxu0 0.0
        %1374 = vmatprep.subr.mxu0 0.0
        %1375 = vmatpush1.msra.mxu0 0.0
        %1376 = vmatprep.subr.mxu0 0.0
        %1377 = vmatpush1.msra.mxu0 0.0
        %1378 = vmatprep.subr.mxu0 0.0
        %1379 = vmatpush1.msra.mxu0 0.0
        %1380 = vmatprep.subr.mxu0 0.0
        %1381 = vmatpush1.msra.mxu0 0.0
        %1382 = vmatprep.subr.mxu0 0.0
        %1383 = vmatpush1.msra.mxu0 0.0
        %1384 = vmatprep.subr.mxu0 0.0
        %1385 = vmatpush1.msra.mxu0 0.0
        %1386 = vmatprep.subr.mxu0 0.0
        %1387 = vmatpush1.msra.mxu0 0.0
        %1388 = vmatprep.subr.mxu0 0.0
        %1389 = vmatpush1.msra.mxu0 0.0
        %1390 = vmatprep.subr.mxu0 0.0
        %1391 = vmatpush1.msra.mxu0 0.0
        %1392 = vmatprep.subr.mxu0 0.0
        %1393 = vmatpush1.msra.mxu0 0.0
        %1394 = vmatprep.subr.mxu0 0.0
        %1395 = vmatpush1.msra.mxu0 0.0
        %1396 = vmatprep.subr.mxu0 0.0
        %1397 = vmatpush1.msra.mxu0 0.0
        %1398 = vmatprep.subr.mxu0 0.0
        %1399 = vmatpush1.msra.mxu0 0.0
        %1400 = vmatprep.subr.mxu0 0.0
        %1401 = vmatpush1.msra.mxu0 0.0
        %1402 = vmatprep.subr.mxu0 0.0
        %1403 = vmatpush1.msra.mxu0 0.0
        %1404 = vmatprep.subr.mxu0 0.0
        %1405 = vmatpush1.msra.mxu0 0.0
        %1406 = vmatprep.subr.mxu0 0.0
        %1407 = vmatpush1.msra.mxu0 0.0
        %1408 = vmatprep.subr.mxu0 0.0
        %1409 = vmatpush1.msra.mxu0 0.0
        %1410 = vmatprep.subr.mxu0 0.0
        %1411 = vmatpush1.msra.mxu0 0.0
        %1412 = vmatprep.subr.mxu0 0.0
        %1413 = vmatpush1.msra.mxu0 0.0
        %1414 = vmatprep.subr.mxu0 0.0
        %1415 = vmatpush1.msra.mxu0 0.0
        %1416 = vmatprep.subr.mxu0 0.0
        %1417 = vmatpush1.msra.mxu0 0.0
        %1418 = vmatprep.subr.mxu0 0.0
        %1419 = vmatpush1.msra.mxu0 0.0
        %1420 = vmatprep.subr.mxu0 0.0
        %1421 = vmatpush1.msra.mxu0 0.0
        %1422 = vmatprep.subr.mxu0 0.0
        %1423 = vmatpush1.msra.mxu0 0.0
        %1424 = vmatprep.subr.mxu0 0.0
        %1425 = vmatpush1.msra.mxu0 0.0
        %1426 = vmatprep.mubr.f32.mxu0 0.0
        %1427 = vmatmul.mubr.f32.gmra.mrb[0].mxu0 %v1346
        %v1428 = vpop.f32.mrb[0].mxu0
        %v1429 = vadd.f32 0.0, %v1428
        %v1430 = vpop.f32.mrb[0].mxu0
        %1431 = vmatprep.mubr.f32.mxu0 0.0
        %1432 = vmatmul.mubr.f32.gmra.mrb[0].mxu0 %v1348
        %v1433 = vpop.f32.mrb[0].mxu0
        %v1434 = vadd.f32 0.0, %v1433
        %v1435 = vpop.f32.mrb[0].mxu0
        %1436 = vmatprep.mubr.f32.mxu0 0.0
        %1437 = vmatmul.mubr.f32.gmra.mrb[0].mxu0 %v1350
        %v1438 = vpop.f32.mrb[0].mxu0
        %v1439 = vadd.f32 0.0, %v1438
        %v1440 = vpop.f32.mrb[0].mxu0
        %1441 = vmatprep.mubr.f32.mxu0 0.0
        %1442 = vmatmul.mubr.f32.gmra.mrb[0].mxu0 %v1352
        %v1443 = vpop.f32.mrb[0].mxu0
        %v1444 = vadd.f32 0.0, %v1443
        %v1445 = vpop.f32.mrb[0].mxu0
        %1446 = vmatprep.mubr.f32.mxu0 0.0
        %1447 = vmatmul.mubr.f32.gmra.mrb[0].mxu0 %v1354
        %v1448 = vpop.f32.mrb[0].mxu0
        %v1449 = vadd.f32 0.0, %v1448
        %v1450 = vpop.f32.mrb[0].mxu0
        %1451 = vmatprep.mubr.f32.mxu0 0.0
        %1452 = vmatmul.mubr.f32.gmra.mrb[0].mxu0 %v1356
        %v1453 = vpop.f32.mrb[0].mxu0
        %v1454 = vadd.f32 0.0, %v1453
        %v1455 = vpop.f32.mrb[0].mxu0
        %1456 = vmatprep.mubr.f32.mxu0 0.0
        %1457 = vmatmul.mubr.f32.gmra.mrb[0].mxu0 %v1358
        %v1458 = vpop.f32.mrb[0].mxu0
        %v1459 = vadd.f32 0.0, %v1458
        %v1460 = vpop.f32.mrb[0].mxu0
        %1461 = vmatprep.mubr.f32.mxu0 0.0
        %1462 = vmatmul.mubr.f32.gmra.mrb[0].mxu0 %v1360
        %v1463 = vpop.f32.mrb[0].mxu0
        %v1464 = vadd.f32 0.0, %v1463
        %v1465 = vpop.f32.mrb[0].mxu0
        %1466 = vdwg.mxu0
        %1467 = vrot.lane.b32.xlu0 %v617, 64
        %v1468 = vpop.permute.xlu0 %1467
        %1469 = vrot.lane.b32.xlu0 %v623, 64
        %v1470 = vpop.permute.xlu0 %1469
        %1471 = vrot.lane.b32.xlu0 %v629, 64
        %v1472 = vpop.permute.xlu0 %1471
        %1473 = vrot.lane.b32.xlu0 %v635, 64
        %v1474 = vpop.permute.xlu0 %1473
        %1475 = vrot.lane.b32.xlu0 %v641, 64
        %v1476 = vpop.permute.xlu0 %1475
        %1477 = vrot.lane.b32.xlu0 %v647, 64
        %v1478 = vpop.permute.xlu0 %1477
        %1479 = vrot.lane.b32.xlu0 %v653, 64
        %v1480 = vpop.permute.xlu0 %1479
        %1481 = vrot.lane.b32.xlu0 %v659, 64
        %v1482 = vpop.permute.xlu0 %1481
        %v1483 = vsel %vm470, %v1468, 0
        %v1485 = vsel %vm470, %v1470, 0
        %v1487 = vsel %vm470, %v1472, 0
        %v1489 = vsel %vm470, %v1474, 0
        %v1491 = vsel %vm470, %v1476, 0
        %v1493 = vsel %vm470, %v1478, 0
        %v1495 = vsel %vm470, %v1480, 0
        %v1497 = vsel %vm470, %v1482, 0
        %1499 = vmatprep.subr.mxu0 0.0
        %1500 = vmatpush1.msra.mxu0 %v508
        %1501 = vmatprep.subr.mxu0 0.0
        %1502 = vmatpush1.msra.mxu0 %v510
        %1503 = vmatprep.subr.mxu0 0.0
        %1504 = vmatpush1.msra.mxu0 %v512
        %1505 = vmatprep.subr.mxu0 0.0
        %1506 = vmatpush1.msra.mxu0 %v514
        %1507 = vmatprep.subr.mxu0 0.0
        %1508 = vmatpush1.msra.mxu0 0.0
        %1509 = vmatprep.subr.mxu0 0.0
        %1510 = vmatpush1.msra.mxu0 0.0
        %1511 = vmatprep.subr.mxu0 0.0
        %1512 = vmatpush1.msra.mxu0 0.0
        %1513 = vmatprep.subr.mxu0 0.0
        %1514 = vmatpush1.msra.mxu0 0.0
        %1515 = vmatprep.subr.mxu0 0.0
        %1516 = vmatpush1.msra.mxu0 0.0
        %1517 = vmatprep.subr.mxu0 0.0
        %1518 = vmatpush1.msra.mxu0 0.0
        %1519 = vmatprep.subr.mxu0 0.0
        %1520 = vmatpush1.msra.mxu0 0.0
        %1521 = vmatprep.subr.mxu0 0.0
        %1522 = vmatpush1.msra.mxu0 0.0
        %1523 = vmatprep.subr.mxu0 0.0
        %1524 = vmatpush1.msra.mxu0 0.0
        %1525 = vmatprep.subr.mxu0 0.0
        %1526 = vmatpush1.msra.mxu0 0.0
        %1527 = vmatprep.subr.mxu0 0.0
        %1528 = vmatpush1.msra.mxu0 0.0
        %1529 = vmatprep.subr.mxu0 0.0
        %1530 = vmatpush1.msra.mxu0 0.0
        %1531 = vmatprep.subr.mxu0 0.0
        %1532 = vmatpush1.msra.mxu0 0.0
        %1533 = vmatprep.subr.mxu0 0.0
        %1534 = vmatpush1.msra.mxu0 0.0
        %1535 = vmatprep.subr.mxu0 0.0
        %1536 = vmatpush1.msra.mxu0 0.0
        %1537 = vmatprep.subr.mxu0 0.0
        %1538 = vmatpush1.msra.mxu0 0.0
        %1539 = vmatprep.subr.mxu0 0.0
        %1540 = vmatpush1.msra.mxu0 0.0
        %1541 = vmatprep.subr.mxu0 0.0
        %1542 = vmatpush1.msra.mxu0 0.0
        %1543 = vmatprep.subr.mxu0 0.0
        %1544 = vmatpush1.msra.mxu0 0.0
        %1545 = vmatprep.subr.mxu0 0.0
        %1546 = vmatpush1.msra.mxu0 0.0
        %1547 = vmatprep.subr.mxu0 0.0
        %1548 = vmatpush1.msra.mxu0 0.0
        %1549 = vmatprep.subr.mxu0 0.0
        %1550 = vmatpush1.msra.mxu0 0.0
        %1551 = vmatprep.subr.mxu0 0.0
        %1552 = vmatpush1.msra.mxu0 0.0
        %1553 = vmatprep.subr.mxu0 0.0
        %1554 = vmatpush1.msra.mxu0 0.0
        %1555 = vmatprep.subr.mxu0 0.0
        %1556 = vmatpush1.msra.mxu0 0.0
        %1557 = vmatprep.subr.mxu0 0.0
        %1558 = vmatpush1.msra.mxu0 0.0
        %1559 = vmatprep.subr.mxu0 0.0
        %1560 = vmatpush1.msra.mxu0 0.0
        %1561 = vmatprep.subr.mxu0 0.0
        %1562 = vmatpush1.msra.mxu0 0.0
        %1563 = vmatprep.mubr.f32.mxu0 0.0
        %1564 = vmatmul.mubr.f32.gmra.mrb[0].mxu0 %v1483
        %v1565 = vpop.f32.mrb[0].mxu0
        %v1566 = vadd.f32 0.0, %v1565
        %v1567 = vpop.f32.mrb[0].mxu0
        %1568 = vmatprep.mubr.f32.mxu0 0.0
        %1569 = vmatmul.mubr.f32.gmra.mrb[0].mxu0 %v1485
        %v1570 = vpop.f32.mrb[0].mxu0
        %v1571 = vadd.f32 0.0, %v1570
        %v1572 = vpop.f32.mrb[0].mxu0
        %1573 = vmatprep.mubr.f32.mxu0 0.0
        %1574 = vmatmul.mubr.f32.gmra.mrb[0].mxu0 %v1487
        %v1575 = vpop.f32.mrb[0].mxu0
        %v1576 = vadd.f32 0.0, %v1575
        %v1577 = vpop.f32.mrb[0].mxu0
        %1578 = vmatprep.mubr.f32.mxu0 0.0
        %1579 = vmatmul.mubr.f32.gmra.mrb[0].mxu0 %v1489
        %v1580 = vpop.f32.mrb[0].mxu0
        %v1581 = vadd.f32 0.0, %v1580
        %v1582 = vpop.f32.mrb[0].mxu0
        %1583 = vmatprep.mubr.f32.mxu0 0.0
        %1584 = vmatmul.mubr.f32.gmra.mrb[0].mxu0 %v1491
        %v1585 = vpop.f32.mrb[0].mxu0
        %v1586 = vadd.f32 0.0, %v1585
        %v1587 = vpop.f32.mrb[0].mxu0
        %1588 = vmatprep.mubr.f32.mxu0 0.0
        %1589 = vmatmul.mubr.f32.gmra.mrb[0].mxu0 %v1493
        %v1590 = vpop.f32.mrb[0].mxu0
        %v1591 = vadd.f32 0.0, %v1590
        %v1592 = vpop.f32.mrb[0].mxu0
        %1593 = vmatprep.mubr.f32.mxu0 0.0
        %1594 = vmatmul.mubr.f32.gmra.mrb[0].mxu0 %v1495
        %v1595 = vpop.f32.mrb[0].mxu0
        %v1596 = vadd.f32 0.0, %v1595
        %v1597 = vpop.f32.mrb[0].mxu0
        %1598 = vmatprep.mubr.f32.mxu0 0.0
        %1599 = vmatmul.mubr.f32.gmra.mrb[0].mxu0 %v1497
        %v1600 = vpop.f32.mrb[0].mxu0
        %v1601 = vadd.f32 0.0, %v1600
        %v1602 = vpop.f32.mrb[0].mxu0
        %1603 = vdwg.mxu0
        %1604 = vrot.lane.b32.xlu0 %v617, 32
        %v1605 = vpop.permute.xlu0 %1604
        %1606 = vrot.lane.b32.xlu0 %v623, 32
        %v1607 = vpop.permute.xlu0 %1606
        %1608 = vrot.lane.b32.xlu0 %v629, 32
        %v1609 = vpop.permute.xlu0 %1608
        %1610 = vrot.lane.b32.xlu0 %v635, 32
        %v1611 = vpop.permute.xlu0 %1610
        %1612 = vrot.lane.b32.xlu0 %v641, 32
        %v1613 = vpop.permute.xlu0 %1612
        %1614 = vrot.lane.b32.xlu0 %v647, 32
        %v1615 = vpop.permute.xlu0 %1614
        %1616 = vrot.lane.b32.xlu0 %v653, 32
        %v1617 = vpop.permute.xlu0 %1616
        %1618 = vrot.lane.b32.xlu0 %v659, 32
        %v1619 = vpop.permute.xlu0 %1618
        %v1620 = vsel %vm470, %v1605, 0
        %v1622 = vsel %vm470, %v1607, 0
        %v1624 = vsel %vm470, %v1609, 0
        %v1626 = vsel %vm470, %v1611, 0
        %v1628 = vsel %vm470, %v1613, 0
        %v1630 = vsel %vm470, %v1615, 0
        %v1632 = vsel %vm470, %v1617, 0
        %v1634 = vsel %vm470, %v1619, 0
        %1636 = vmatprep.subr.mxu0 0.0
        %1637 = vmatpush1.msra.mxu0 %v508
        %1638 = vmatprep.subr.mxu0 0.0
        %1639 = vmatpush1.msra.mxu0 %v510
        %1640 = vmatprep.subr.mxu0 0.0
        %1641 = vmatpush1.msra.mxu0 %v512
        %1642 = vmatprep.subr.mxu0 0.0
        %1643 = vmatpush1.msra.mxu0 %v514
        %1644 = vmatprep.subr.mxu0 0.0
        %1645 = vmatpush1.msra.mxu0 0.0
        %1646 = vmatprep.subr.mxu0 0.0
        %1647 = vmatpush1.msra.mxu0 0.0
        %1648 = vmatprep.subr.mxu0 0.0
        %1649 = vmatpush1.msra.mxu0 0.0
        %1650 = vmatprep.subr.mxu0 0.0
        %1651 = vmatpush1.msra.mxu0 0.0
        %1652 = vmatprep.subr.mxu0 0.0
        %1653 = vmatpush1.msra.mxu0 0.0
        %1654 = vmatprep.subr.mxu0 0.0
        %1655 = vmatpush1.msra.mxu0 0.0
        %1656 = vmatprep.subr.mxu0 0.0
        %1657 = vmatpush1.msra.mxu0 0.0
        %1658 = vmatprep.subr.mxu0 0.0
        %1659 = vmatpush1.msra.mxu0 0.0
        %1660 = vmatprep.subr.mxu0 0.0
        %1661 = vmatpush1.msra.mxu0 0.0
        %1662 = vmatprep.subr.mxu0 0.0
        %1663 = vmatpush1.msra.mxu0 0.0
        %1664 = vmatprep.subr.mxu0 0.0
        %1665 = vmatpush1.msra.mxu0 0.0
        %1666 = vmatprep.subr.mxu0 0.0
        %1667 = vmatpush1.msra.mxu0 0.0
        %1668 = vmatprep.subr.mxu0 0.0
        %1669 = vmatpush1.msra.mxu0 0.0
        %1670 = vmatprep.subr.mxu0 0.0
        %1671 = vmatpush1.msra.mxu0 0.0
        %1672 = vmatprep.subr.mxu0 0.0
        %1673 = vmatpush1.msra.mxu0 0.0
        %1674 = vmatprep.subr.mxu0 0.0
        %1675 = vmatpush1.msra.mxu0 0.0
        %1676 = vmatprep.subr.mxu0 0.0
        %1677 = vmatpush1.msra.mxu0 0.0
        %1678 = vmatprep.subr.mxu0 0.0
        %1679 = vmatpush1.msra.mxu0 0.0
        %1680 = vmatprep.subr.mxu0 0.0
        %1681 = vmatpush1.msra.mxu0 0.0
        %1682 = vmatprep.subr.mxu0 0.0
        %1683 = vmatpush1.msra.mxu0 0.0
        %1684 = vmatprep.subr.mxu0 0.0
        %1685 = vmatpush1.msra.mxu0 0.0
        %1686 = vmatprep.subr.mxu0 0.0
        %1687 = vmatpush1.msra.mxu0 0.0
        %1688 = vmatprep.subr.mxu0 0.0
        %1689 = vmatpush1.msra.mxu0 0.0
        %1690 = vmatprep.subr.mxu0 0.0
        %1691 = vmatpush1.msra.mxu0 0.0
        %1692 = vmatprep.subr.mxu0 0.0
        %1693 = vmatpush1.msra.mxu0 0.0
        %1694 = vmatprep.subr.mxu0 0.0
        %1695 = vmatpush1.msra.mxu0 0.0
        %1696 = vmatprep.subr.mxu0 0.0
        %1697 = vmatpush1.msra.mxu0 0.0
        %1698 = vmatprep.subr.mxu0 0.0
        %1699 = vmatpush1.msra.mxu0 0.0
        %1700 = vmatprep.mubr.f32.mxu0 0.0
        %1701 = vmatmul.mubr.f32.gmra.mrb[0].mxu0 %v1620
        %v1702 = vpop.f32.mrb[0].mxu0
        %v1703 = vadd.f32 0.0, %v1702
        %v1704 = vpop.f32.mrb[0].mxu0
        %1705 = vmatprep.mubr.f32.mxu0 0.0
        %1706 = vmatmul.mubr.f32.gmra.mrb[0].mxu0 %v1622
        %v1707 = vpop.f32.mrb[0].mxu0
        %v1708 = vadd.f32 0.0, %v1707
        %v1709 = vpop.f32.mrb[0].mxu0
        %1710 = vmatprep.mubr.f32.mxu0 0.0
        %1711 = vmatmul.mubr.f32.gmra.mrb[0].mxu0 %v1624
        %v1712 = vpop.f32.mrb[0].mxu0
        %v1713 = vadd.f32 0.0, %v1712
        %v1714 = vpop.f32.mrb[0].mxu0
        %1715 = vmatprep.mubr.f32.mxu0 0.0
        %1716 = vmatmul.mubr.f32.gmra.mrb[0].mxu0 %v1626
        %v1717 = vpop.f32.mrb[0].mxu0
        %v1718 = vadd.f32 0.0, %v1717
        %v1719 = vpop.f32.mrb[0].mxu0
        %1720 = vmatprep.mubr.f32.mxu0 0.0
        %1721 = vmatmul.mubr.f32.gmra.mrb[0].mxu0 %v1628
        %v1722 = vpop.f32.mrb[0].mxu0
        %v1723 = vadd.f32 0.0, %v1722
        %v1724 = vpop.f32.mrb[0].mxu0
        %1725 = vmatprep.mubr.f32.mxu0 0.0
        %1726 = vmatmul.mubr.f32.gmra.mrb[0].mxu0 %v1630
        %v1727 = vpop.f32.mrb[0].mxu0
        %v1728 = vadd.f32 0.0, %v1727
        %v1729 = vpop.f32.mrb[0].mxu0
        %1730 = vmatprep.mubr.f32.mxu0 0.0
        %1731 = vmatmul.mubr.f32.gmra.mrb[0].mxu0 %v1632
        %v1732 = vpop.f32.mrb[0].mxu0
        %v1733 = vadd.f32 0.0, %v1732
        %v1734 = vpop.f32.mrb[0].mxu0
        %1735 = vmatprep.mubr.f32.mxu0 0.0
        %1736 = vmatmul.mubr.f32.gmra.mrb[0].mxu0 %v1634
        %v1737 = vpop.f32.mrb[0].mxu0
        %v1738 = vadd.f32 0.0, %v1737
        %v1739 = vpop.f32.mrb[0].mxu0
        %1740 = vdwg.mxu0
        %1749 = vrot.lane.b32.xlu0 %v889, 32
        %v1750 = vpop.permute.xlu0 %1749
        %1751 = vrot.lane.b32.xlu0 %v894, 32
        %v1752 = vpop.permute.xlu0 %1751
        %1753 = vrot.lane.b32.xlu0 %v899, 32
        %v1754 = vpop.permute.xlu0 %1753
        %1755 = vrot.lane.b32.xlu0 %v904, 32
        %v1756 = vpop.permute.xlu0 %1755
        %1757 = vrot.lane.b32.xlu0 %v909, 32
        %v1758 = vpop.permute.xlu0 %1757
        %1759 = vrot.lane.b32.xlu0 %v914, 32
        %v1760 = vpop.permute.xlu0 %1759
        %1761 = vrot.lane.b32.xlu0 %v919, 32
        %v1762 = vpop.permute.xlu0 %1761
        %1763 = vrot.lane.b32.xlu0 %v924, 32
        %v1764 = vpop.permute.xlu0 %1763
        %1781 = vrot.lane.b32.xlu0 %v1026, 64
        %v1782 = vpop.permute.xlu0 %1781
        %1783 = vrot.lane.b32.xlu0 %v1031, 64
        %v1784 = vpop.permute.xlu0 %1783
        %1785 = vrot.lane.b32.xlu0 %v1036, 64
        %v1786 = vpop.permute.xlu0 %1785
        %1787 = vrot.lane.b32.xlu0 %v1041, 64
        %v1788 = vpop.permute.xlu0 %1787
        %1789 = vrot.lane.b32.xlu0 %v1046, 64
        %v1790 = vpop.permute.xlu0 %1789
        %1791 = vrot.lane.b32.xlu0 %v1051, 64
        %v1792 = vpop.permute.xlu0 %1791
        %1793 = vrot.lane.b32.xlu0 %v1056, 64
        %v1794 = vpop.permute.xlu0 %1793
        %1795 = vrot.lane.b32.xlu0 %v1061, 64
        %v1796 = vpop.permute.xlu0 %1795
        %1813 = vrot.lane.b32.xlu0 %v1163, 96
        %v1814 = vpop.permute.xlu0 %1813
        %1815 = vrot.lane.b32.xlu0 %v1168, 96
        %v1816 = vpop.permute.xlu0 %1815
        %1817 = vrot.lane.b32.xlu0 %v1173, 96
        %v1818 = vpop.permute.xlu0 %1817
        %1819 = vrot.lane.b32.xlu0 %v1178, 96
        %v1820 = vpop.permute.xlu0 %1819
        %1821 = vrot.lane.b32.xlu0 %v1183, 96
        %v1822 = vpop.permute.xlu0 %1821
        %1823 = vrot.lane.b32.xlu0 %v1188, 96
        %v1824 = vpop.permute.xlu0 %1823
        %1825 = vrot.lane.b32.xlu0 %v1193, 96
        %v1826 = vpop.permute.xlu0 %1825
        %1827 = vrot.lane.b32.xlu0 %v1198, 96
        %v1828 = vpop.permute.xlu0 %1827
        %1845 = vrot.lane.b32.xlu0 %v1429, 32
        %v1846 = vpop.permute.xlu0 %1845
        %1847 = vrot.lane.b32.xlu0 %v1434, 32
        %v1848 = vpop.permute.xlu0 %1847
        %1849 = vrot.lane.b32.xlu0 %v1439, 32
        %v1850 = vpop.permute.xlu0 %1849
        %1851 = vrot.lane.b32.xlu0 %v1444, 32
        %v1852 = vpop.permute.xlu0 %1851
        %1853 = vrot.lane.b32.xlu0 %v1449, 32
        %v1854 = vpop.permute.xlu0 %1853
        %1855 = vrot.lane.b32.xlu0 %v1454, 32
        %v1856 = vpop.permute.xlu0 %1855
        %1857 = vrot.lane.b32.xlu0 %v1459, 32
        %v1858 = vpop.permute.xlu0 %1857
        %1859 = vrot.lane.b32.xlu0 %v1464, 32
        %v1860 = vpop.permute.xlu0 %1859
        %1877 = vrot.lane.b32.xlu0 %v1566, 64
        %v1878 = vpop.permute.xlu0 %1877
        %1879 = vrot.lane.b32.xlu0 %v1571, 64
        %v1880 = vpop.permute.xlu0 %1879
        %1881 = vrot.lane.b32.xlu0 %v1576, 64
        %v1882 = vpop.permute.xlu0 %1881
        %1883 = vrot.lane.b32.xlu0 %v1581, 64
        %v1884 = vpop.permute.xlu0 %1883
        %1885 = vrot.lane.b32.xlu0 %v1586, 64
        %v1886 = vpop.permute.xlu0 %1885
        %1887 = vrot.lane.b32.xlu0 %v1591, 64
        %v1888 = vpop.permute.xlu0 %1887
        %1889 = vrot.lane.b32.xlu0 %v1596, 64
        %v1890 = vpop.permute.xlu0 %1889
        %1891 = vrot.lane.b32.xlu0 %v1601, 64
        %v1892 = vpop.permute.xlu0 %1891
        %1909 = vrot.lane.b32.xlu0 %v1703, 96
        %v1910 = vpop.permute.xlu0 %1909
        %1911 = vrot.lane.b32.xlu0 %v1708, 96
        %v1912 = vpop.permute.xlu0 %1911
        %1913 = vrot.lane.b32.xlu0 %v1713, 96
        %v1914 = vpop.permute.xlu0 %1913
        %1915 = vrot.lane.b32.xlu0 %v1718, 96
        %v1916 = vpop.permute.xlu0 %1915
        %1917 = vrot.lane.b32.xlu0 %v1723, 96
        %v1918 = vpop.permute.xlu0 %1917
        %1919 = vrot.lane.b32.xlu0 %v1728, 96
        %v1920 = vpop.permute.xlu0 %1919
        %1921 = vrot.lane.b32.xlu0 %v1733, 96
        %v1922 = vpop.permute.xlu0 %1921
        %1923 = vrot.lane.b32.xlu0 %v1738, 96
        %v1924 = vpop.permute.xlu0 %1923
        %v1933 = vsel %vm470, %v752, %v1750
        %v1934 = vsel %vm470, %v757, %v1752
        %v1935 = vsel %vm470, %v762, %v1754
        %v1936 = vsel %vm470, %v767, %v1756
        %v1937 = vsel %vm470, %v772, %v1758
        %v1938 = vsel %vm470, %v777, %v1760
        %v1939 = vsel %vm470, %v782, %v1762
        %v1940 = vsel %vm470, %v787, %v1764
        %v1941 = vsel %vm208, %v1933, %v1782
        %v1942 = vsel %vm208, %v1934, %v1784
        %v1943 = vsel %vm208, %v1935, %v1786
        %v1944 = vsel %vm208, %v1936, %v1788
        %v1945 = vsel %vm208, %v1937, %v1790
        %v1946 = vsel %vm208, %v1938, %v1792
        %v1947 = vsel %vm208, %v1939, %v1794
        %v1948 = vsel %vm208, %v1940, %v1796
        %vm1949 = vcmask 785408
        %v1950 = vsel %vm1949, %v1941, %v1814
        %v1951 = vsel %vm1949, %v1942, %v1816
        %v1952 = vsel %vm1949, %v1943, %v1818
        %v1953 = vsel %vm1949, %v1944, %v1820
        %v1954 = vsel %vm1949, %v1945, %v1822
        %v1955 = vsel %vm1949, %v1946, %v1824
        %v1956 = vsel %vm1949, %v1947, %v1826
        %v1957 = vsel %vm1949, %v1948, %v1828
        %v1958 = vsel %vm470, %v1292, %v1846
        %v1959 = vsel %vm470, %v1297, %v1848
        %v1960 = vsel %vm470, %v1302, %v1850
        %v1961 = vsel %vm470, %v1307, %v1852
        %v1962 = vsel %vm470, %v1312, %v1854
        %v1963 = vsel %vm470, %v1317, %v1856
        %v1964 = vsel %vm470, %v1322, %v1858
        %v1965 = vsel %vm470, %v1327, %v1860
        %v1966 = vsel %vm208, %v1958, %v1878
        %v1967 = vsel %vm208, %v1959, %v1880
        %v1968 = vsel %vm208, %v1960, %v1882
        %v1969 = vsel %vm208, %v1961, %v1884
        %v1970 = vsel %vm208, %v1962, %v1886
        %v1971 = vsel %vm208, %v1963, %v1888
        %v1972 = vsel %vm208, %v1964, %v1890
        %v1973 = vsel %vm208, %v1965, %v1892
        %v1974 = vsel %vm1949, %v1966, %v1910
        %v1975 = vsel %vm1949, %v1967, %v1912
        %v1976 = vsel %vm1949, %v1968, %v1914
        %v1977 = vsel %vm1949, %v1969, %v1916
        %v1978 = vsel %vm1949, %v1970, %v1918
        %v1979 = vsel %vm1949, %v1971, %v1920
        %v1980 = vsel %vm1949, %v1972, %v1922
        %v1981 = vsel %vm1949, %v1973, %v1924
        %1982 = vst [vmem:[%s188] sm:$0xff] %v1950
        %1983 = vst [vmem:[%s188 + $0x8] sm:$0xff] %v1974
        %1984 = vst [vmem:[%s188 + $0x10] sm:$0xff] %v1951
        %1985 = vst [vmem:[%s188 + $0x18] sm:$0xff] %v1975
        %1986 = vst [vmem:[%s188 + $0x20] sm:$0xff] %v1952
        %1987 = vst [vmem:[%s188 + $0x28] sm:$0xff] %v1976
        %1988 = vst [vmem:[%s188 + $0x30] sm:$0xff] %v1953
        %1989 = vst [vmem:[%s188 + $0x38] sm:$0xff] %v1977
        %1990 = vst [vmem:[%s188 + $0x40] sm:$0xff] %v1954
        %1991 = vst [vmem:[%s188 + $0x48] sm:$0xff] %v1978
        %1992 = vst [vmem:[%s188 + $0x50] sm:$0xff] %v1955
        %1993 = vst [vmem:[%s188 + $0x58] sm:$0xff] %v1979
        %1994 = vst [vmem:[%s188 + $0x60] sm:$0xff] %v1956
        %1995 = vst [vmem:[%s188 + $0x68] sm:$0xff] %v1980
        %1996 = vst [vmem:[%s188 + $0x70] sm:$0xff] %v1957
        %1997 = vst [vmem:[%s188 + $0x78] sm:$0xff] %v1981
        %s1998 = sand.u32 %s96, 1
        %s1999 = scalar_lea.sflag [#allocation4], %s1998
        %s2000 = sand.u32 %s96, 1
        %s2001 = smul.addr %s2000, 128
        %s2002 = scalar_lea.vmem [#allocation5], %s2001
        // Predicated region
        $region37: #{tpu_custom_call.1} parent=31 // pred_check
          %p2003 = pneg %p106
        $region38: #{tpu_custom_call.1} parent=31 // pred_check_branch
          %2005 = sbr.rel (%p2003) target = $region40
        $region39: #{tpu_custom_call.1} parent=31 // pred_region
          %s2007 = ssub.s32 2048, 2048
          %2008 = vsyncadd %s1999, %s2007
          %s2009 = smul.addr %s20, 16
          %s2010 = smul.addr %s2009, 128
          %s2011 = scalar_lea.hbm %s3, %s2010
          %s2012 = sshll.u32 %s2002, 4
          %s2013 = int_to_ptr.vmem [resolvable:$true] %s2012
          %2018 = dma.vmem_to_hbm [thread:$0]  %s2013, 2048, %s2011, %s1999, 256, 256, 16
        $region40: #{tpu_custom_call.1} parent=31 // pred_fallthru
          _
      $region32: #{tpu_custom_call.1} parent=5 // pred_fallthru
        _
      %p2019 = scmp.le.s32.totalorder 2, %s15
      // Predicated region
      $region41: #{tpu_custom_call.1} parent=5 // pred_check
        %p2020 = pneg %p2019
      $region42: #{tpu_custom_call.1} parent=5 // pred_check_branch
        %2022 = sbr.rel (%p2020) target = $region44
      $region43: #{tpu_custom_call.1} parent=5 // pred_region
        %s2023 = ssub.s32 %s15, 2
        // Predicated region
        $region45: #{tpu_custom_call.1} parent=43 // pred_check
          %p2024 = pneg %p112
        $region46: #{tpu_custom_call.1} parent=43 // pred_check_branch
          %2026 = sbr.rel (%p2024) target = $region48
        $region47: #{tpu_custom_call.1} parent=43 // pred_region
          %s2027 = sand.u32 %s97, 1
          %s2028 = scalar_lea.sflag [#allocation4], %s2027
          %s2029 = sand.u32 %s97, 1
          %s2030 = smul.addr %s2029, 128
          %s2031 = scalar_lea.vmem [#allocation5], %s2030
          %2032 = dma.done %s2028, 2048
        $region48: #{tpu_custom_call.1} parent=43 // pred_fallthru
          _
      $region44: #{tpu_custom_call.1} parent=5 // pred_fallthru
        _
    $region6: #{tpu_custom_call.1} parent=1 // loop_footer
      %s19 = sadd.s32 1, %s15
    $region7: #{tpu_custom_call.1} parent=1 // loop_footer_branch
      %14 = sbr.rel target = $region3
    $region8: #{tpu_custom_call.1} parent=1 // loop_exit
      _
    %2033 = vsyncpa [#allocation3], 1
    %s2034 = scalar_lea.sflag [#allocation3], 1
    %2035 = vsyncpa %s2034, 1
    %2036 = vsyncpa [#allocation4], 1
    %s2037 = scalar_lea.sflag [#allocation4], 1
    %2038 = vsyncpa %s2037, 1

</llo_original>
